<compile_context>
chip_gen: v7x
topology: tpu7x:2x2x1
jax: 0.10.0
libtpu: 0.0.40
codegen_flags: <defaults>
</compile_context>

<pallas_src>
import jax
import jax.numpy as jnp
from jax.experimental import pallas as pl
from jax.experimental.pallas import tpu as pltpu

EPS = 1e-5
HIDDEN = 1000     # l2 output / BatchNorm1d features
N_OUT = 2500      # l3 output features (-> 50 x 50)
TILE_N = 640      # lane-dense output tile width (5 x 128)
N_PAD = 2560      # 2500 padded up to 4 * 640
N_TILES = N_PAD // TILE_N   # 4 grid steps


def mlp_kernel(x_ref, w1_ref, w2_ref, b2_ref, gamma_ref, beta_ref, w3_ref,
               o_ref):
    # ---- Front layers: recomputed every grid step (cheap, hides under DMA,
    #      and keeps every step independent so the grid axis can be parallel).
    x = x_ref[...]                                       # (B, 1)
    # l1: Linear(1 -> 10, bias=False) + Tanh.  K=1 matmul == outer product,
    # so do it on the VPU as a broadcast multiply instead of the MXU.
    h1 = jnp.tanh(x * w1_ref[...])                       # (B, 10)
    # l2: Linear(10 -> 1000, bias=True) + Tanh.
    h2 = jnp.tanh(
        jnp.dot(h1, w2_ref[...], preferred_element_type=jnp.float32)
        + b2_ref[...])                                   # (B, 1000)
    # BatchNorm1d(1000), training mode: biased batch stats over the full batch.
    mean = jnp.mean(h2, axis=0, keepdims=True)           # (1, 1000)
    diff = h2 - mean
    var = jnp.mean(diff * diff, axis=0, keepdims=True)
    h = (diff * jax.lax.rsqrt(var + EPS)) * gamma_ref[...] + beta_ref[...]

    # ---- Steady state: one 640-wide w3 tile per grid step.
    # l3: Linear(1000 -> 2500, bias=False) + ReLU, lane-dense store.
    h3 = jnp.dot(h, w3_ref[...],
                 preferred_element_type=jnp.float32)      # (B, TILE_N)
    o_ref[...] = jnp.maximum(h3, 0.0)


@jax.jit
def mlp_forward(x, w1, w2, b2, gamma, beta, w3p):
    """w3p must already be zero-padded to (HIDDEN, N_PAD); see pad_w3()."""
    B = x.shape[0]

    cost = pl.CostEstimate(
        flops=(2 * B * HIDDEN * N_PAD
               + N_TILES * (2 * B * 10 * HIDDEN + 2 * B * 10)),
        transcendentals=N_TILES * B * (HIDDEN + 10),
        bytes_accessed=(HIDDEN * N_PAD * 4            # w3 stream (dominant)
                        + B * N_PAD * 4               # output
                        + (10 * HIDDEN + 3 * HIDDEN + 10 + B) * 4),
    )

    out = pl.pallas_call(
        mlp_kernel,
        out_shape=jax.ShapeDtypeStruct((B, N_PAD), jnp.float32),
        grid_spec=pltpu.PrefetchScalarGridSpec(
            num_scalar_prefetch=0,
            grid=(N_TILES,),
            in_specs=[
                pl.BlockSpec((B, 1), lambda j: (0, 0)),            # x
                pl.BlockSpec((1, 10), lambda j: (0, 0)),           # w1 (in,out)
                pl.BlockSpec((10, HIDDEN), lambda j: (0, 0)),      # w2
                pl.BlockSpec((1, HIDDEN), lambda j: (0, 0)),       # b2
                pl.BlockSpec((1, HIDDEN), lambda j: (0, 0)),       # gamma
                pl.BlockSpec((1, HIDDEN), lambda j: (0, 0)),       # beta
                pl.BlockSpec((HIDDEN, TILE_N), lambda j: (0, j)),  # w3 tile
            ],
            out_specs=pl.BlockSpec((B, TILE_N), lambda j: (0, j)),
        ),
        compiler_params=pltpu.CompilerParams(
            # Every step is independent -> parallel (enables v7x megacore).
            dimension_semantics=("parallel",),
            vmem_limit_bytes=16 << 20,
        ),
        cost_estimate=cost,
    )(x, w1, w2, b2, gamma, beta, w3p)

    # Drop lane padding; nn.Unflatten(1, [50, 50]) is a pure reshape.
    return out[:, :N_OUT].reshape(B, 50, 50)


def pad_w3(w3):
    """Zero-pad w3 output columns 2500 -> 2560 once, OUTSIDE the jitted forward,
    so every kernel output store is an unmasked lane-dense tile and no per-call
    HBM copy of the 10 MB weight is made."""
    return jnp.pad(w3, ((0, 0), (0, N_PAD - N_OUT)))


def init_params(key):
    """Deterministic init mimicking PyTorch Linear defaults (uniform +-1/sqrt(fan_in)).

    Weights are stored as (in_features, out_features); w3 is returned pre-padded."""
    k1, k2, k2b, k3 = jax.random.split(key, 4)

    def lin_w(k, fan_in, fan_out):
        bound = 1.0 / jnp.sqrt(jnp.float32(fan_in))
        return jax.random.uniform(k, (fan_in, fan_out), jnp.float32,
                                  minval=-bound, maxval=bound)

    w1 = lin_w(k1, 1, 10)
    w2 = lin_w(k2, 10, HIDDEN)
    b2 = jax.random.uniform(k2b, (1, HIDDEN), jnp.float32,
                            minval=-1.0 / jnp.sqrt(10.0),
                            maxval=1.0 / jnp.sqrt(10.0))
    w3 = lin_w(k3, HIDDEN, N_OUT)
    gamma = jnp.ones((1, HIDDEN), jnp.float32)   # BatchNorm1d default weight
    beta = jnp.zeros((1, HIDDEN), jnp.float32)   # BatchNorm1d default bias
    w3p = pad_w3(w3)                             # pad once, at init
    return w1, w2, b2, gamma, beta, w3p


if __name__ == "__main__":
    key = jax.random.PRNGKey(0)
    kx, kp = jax.random.split(key)

    B = 8
    x = jax.random.normal(kx, (B, 1), jnp.float32)
    w1, w2, b2, gamma, beta, w3p = init_params(kp)

    y = mlp_forward(x, w1, w2, b2, gamma, beta, w3p)
    y = jax.block_until_ready(y)
    assert y.shape == (B, 50, 50), y.shape
    assert y.dtype == jnp.float32
    print("KERNEL_OK")
</pallas_src>

<mosaic_0001>
module attributes {stable_mosaic.version = 11 : i64} {
  func.func @mlp_kernel(%arg0: i32, %arg1: memref<8x1xf32, #tpu.memory_space<vmem>>, %arg2: memref<1x10xf32, #tpu.memory_space<vmem>>, %arg3: memref<10x1000xf32, #tpu.memory_space<vmem>>, %arg4: memref<1x1000xf32, #tpu.memory_space<vmem>>, %arg5: memref<1x1000xf32, #tpu.memory_space<vmem>>, %arg6: memref<1x1000xf32, #tpu.memory_space<vmem>>, %arg7: memref<1000x640xf32, #tpu.memory_space<vmem>>, %arg8: memref<8x640xf32, #tpu.memory_space<vmem>>) attributes {dimension_semantics = [#tpu.dimension_semantics<parallel>], iteration_bounds = array<i64: 4>, scalar_prefetch = 0 : i64, scratch_operands = 0 : i64, tpu.core_type = #tpu.core_type<tc>, window_params = [{pipeline_mode = #tpu.pipeline_mode<synchronous>, transform_indices = @transform_0, window_bounds = array<i64: 8, 1>}, {pipeline_mode = #tpu.pipeline_mode<synchronous>, transform_indices = @transform_1, window_bounds = array<i64: 1, 10>}, {pipeline_mode = #tpu.pipeline_mode<synchronous>, transform_indices = @transform_2, window_bounds = array<i64: 10, 1000>}, {pipeline_mode = #tpu.pipeline_mode<synchronous>, transform_indices = @transform_3, window_bounds = array<i64: 1, 1000>}, {pipeline_mode = #tpu.pipeline_mode<synchronous>, transform_indices = @transform_4, window_bounds = array<i64: 1, 1000>}, {pipeline_mode = #tpu.pipeline_mode<synchronous>, transform_indices = @transform_5, window_bounds = array<i64: 1, 1000>}, {transform_indices = @transform_6, window_bounds = array<i64: 1000, 640>}, {transform_indices = @transform_7, window_bounds = array<i64: 8, 640>}]} {
    %c0 = arith.constant 0 : index
    %c0_0 = arith.constant 0 : index
    %0 = vector.load %arg1[%c0, %c0_0] : memref<8x1xf32, #tpu.memory_space<vmem>>, vector<8x1xf32>
    %c0_1 = arith.constant 0 : index
    %c0_2 = arith.constant 0 : index
    %1 = vector.load %arg2[%c0_1, %c0_2] : memref<1x10xf32, #tpu.memory_space<vmem>>, vector<1x10xf32>
    %2 = vector.broadcast %0 : vector<8x1xf32> to vector<8x10xf32>
    %3 = vector.broadcast %1 : vector<1x10xf32> to vector<8x10xf32>
    %4 = arith.mulf %2, %3 : vector<8x10xf32>
    %5 = math.tanh %4 : vector<8x10xf32>
    %c0_3 = arith.constant 0 : index
    %c0_4 = arith.constant 0 : index
    %6 = vector.load %arg3[%c0_3, %c0_4] : memref<10x1000xf32, #tpu.memory_space<vmem>>, vector<10x1000xf32>
    %cst = arith.constant dense<0.000000e+00> : vector<8x1000xf32>
    %7 = tpu.matmul %5, %6, %cst {dimension_numbers = #tpu.dot_dimension_numbers<[1], [0], [0], [1], [0, 0, 1, 1], [], []>} : vector<8x10xf32>, vector<10x1000xf32>, vector<8x1000xf32> -> vector<8x1000xf32>
    %c0_5 = arith.constant 0 : index
    %c0_6 = arith.constant 0 : index
    %8 = vector.load %arg4[%c0_5, %c0_6] : memref<1x1000xf32, #tpu.memory_space<vmem>>, vector<1x1000xf32>
    %9 = vector.broadcast %8 : vector<1x1000xf32> to vector<8x1000xf32>
    %10 = arith.addf %7, %9 : vector<8x1000xf32>
    %11 = math.tanh %10 : vector<8x1000xf32>
    %cst_7 = arith.constant dense<0.000000e+00> : vector<1000xf32>
    %12 = vector.multi_reduction <add>, %11, %cst_7 [0] : vector<8x1000xf32> to vector<1000xf32>
    %13 = vector.shape_cast %12 : vector<1000xf32> to vector<1x1000xf32>
    %cst_8 = arith.constant 8.000000e+00 : f32
    %14 = vector.broadcast %cst_8 : f32 to vector<1x1000xf32>
    %15 = arith.divf %13, %14 : vector<1x1000xf32>
    %16 = vector.broadcast %15 : vector<1x1000xf32> to vector<8x1000xf32>
    %17 = arith.subf %11, %16 : vector<8x1000xf32>
    %18 = arith.mulf %17, %17 : vector<8x1000xf32>
    %cst_9 = arith.constant dense<0.000000e+00> : vector<1000xf32>
    %19 = vector.multi_reduction <add>, %18, %cst_9 [0] : vector<8x1000xf32> to vector<1000xf32>
    %20 = vector.shape_cast %19 : vector<1000xf32> to vector<1x1000xf32>
    %cst_10 = arith.constant 8.000000e+00 : f32
    %21 = vector.broadcast %cst_10 : f32 to vector<1x1000xf32>
    %22 = arith.divf %20, %21 : vector<1x1000xf32>
    %cst_11 = arith.constant 9.99999974E-6 : f32
    %23 = vector.broadcast %cst_11 : f32 to vector<1x1000xf32>
    %24 = arith.addf %22, %23 : vector<1x1000xf32>
    %25 = math.rsqrt %24 : vector<1x1000xf32>
    %26 = vector.broadcast %25 : vector<1x1000xf32> to vector<8x1000xf32>
    %27 = arith.mulf %17, %26 : vector<8x1000xf32>
    %c0_12 = arith.constant 0 : index
    %c0_13 = arith.constant 0 : index
    %28 = vector.load %arg5[%c0_12, %c0_13] : memref<1x1000xf32, #tpu.memory_space<vmem>>, vector<1x1000xf32>
    %29 = vector.broadcast %28 : vector<1x1000xf32> to vector<8x1000xf32>
    %30 = arith.mulf %27, %29 : vector<8x1000xf32>
    %c0_14 = arith.constant 0 : index
    %c0_15 = arith.constant 0 : index
    %31 = vector.load %arg6[%c0_14, %c0_15] : memref<1x1000xf32, #tpu.memory_space<vmem>>, vector<1x1000xf32>
    %32 = vector.broadcast %31 : vector<1x1000xf32> to vector<8x1000xf32>
    %33 = arith.addf %30, %32 : vector<8x1000xf32>
    %c0_16 = arith.constant 0 : index
    %c0_17 = arith.constant 0 : index
    %34 = vector.load %arg7[%c0_16, %c0_17] : memref<1000x640xf32, #tpu.memory_space<vmem>>, vector<1000x640xf32>
    %cst_18 = arith.constant dense<0.000000e+00> : vector<8x640xf32>
    %35 = tpu.matmul %33, %34, %cst_18 {dimension_numbers = #tpu.dot_dimension_numbers<[1], [0], [0], [1], [0, 0, 1, 1], [], []>} : vector<8x1000xf32>, vector<1000x640xf32>, vector<8x640xf32> -> vector<8x640xf32>
    %cst_19 = arith.constant 0.000000e+00 : f32
    %36 = vector.broadcast %cst_19 : f32 to vector<8x640xf32>
    %37 = arith.maximumf %35, %36 : vector<8x640xf32>
    %c0_20 = arith.constant 0 : index
    %c0_21 = arith.constant 0 : index
    %38 = vector.load %arg8[%c0_20, %c0_21] : memref<8x640xf32, #tpu.memory_space<vmem>>, vector<8x640xf32>
    tpu.vector_store %arg8[%c0_20, %c0_21], %37 {strides = array<i32>} : memref<8x640xf32, #tpu.memory_space<vmem>>, vector<8x640xf32>,
    return
  }
  func.func @transform_0(%arg0: i32) -> (i32, i32) {
    %c0_i32 = arith.constant 0 : i32
    %c0_i32_0 = arith.constant 0 : i32
    %c0_i32_1 = arith.constant 0 : i32
    return %c0_i32, %c0_i32_0 : i32, i32
  }
  func.func @transform_1(%arg0: i32) -> (i32, i32) {
    %c0_i32 = arith.constant 0 : i32
    %c0_i32_0 = arith.constant 0 : i32
    %c0_i32_1 = arith.constant 0 : i32
    return %c0_i32, %c0_i32_0 : i32, i32
  }
  func.func @transform_2(%arg0: i32) -> (i32, i32) {
    %c0_i32 = arith.constant 0 : i32
    %c0_i32_0 = arith.constant 0 : i32
    %c0_i32_1 = arith.constant 0 : i32
    return %c0_i32, %c0_i32_0 : i32, i32
  }
  func.func @transform_3(%arg0: i32) -> (i32, i32) {
    %c0_i32 = arith.constant 0 : i32
    %c0_i32_0 = arith.constant 0 : i32
    %c0_i32_1 = arith.constant 0 : i32
    return %c0_i32, %c0_i32_0 : i32, i32
  }
  func.func @transform_4(%arg0: i32) -> (i32, i32) {
    %c0_i32 = arith.constant 0 : i32
    %c0_i32_0 = arith.constant 0 : i32
    %c0_i32_1 = arith.constant 0 : i32
    return %c0_i32, %c0_i32_0 : i32, i32
  }
  func.func @transform_5(%arg0: i32) -> (i32, i32) {
    %c0_i32 = arith.constant 0 : i32
    %c0_i32_0 = arith.constant 0 : i32
    %c0_i32_1 = arith.constant 0 : i32
    return %c0_i32, %c0_i32_0 : i32, i32
  }
  func.func @transform_6(%arg0: i32) -> (i32, i32) {
    %c0_i32 = arith.constant 0 : i32
    %c0_i32_0 = arith.constant 0 : i32
    return %c0_i32, %arg0 : i32, i32
  }
  func.func @transform_7(%arg0: i32) -> (i32, i32) {
    %c0_i32 = arith.constant 0 : i32
    %c0_i32_0 = arith.constant 0 : i32
    return %c0_i32, %arg0 : i32, i32
  }
}

</mosaic_0001>

<llo_original>
// kernel: mlp_forward.1
$region0: #{mlp_forward.1}
  #allocation0 [shape = 'u32[]', space=smem, size = 0x4, offset = 0x4, fixed_abs, tag = 'smem constant byte address 0x4 - core index']
  #allocation1 [shape = 'u32[144,128]{1,0:T(1,128)}', space=vmem, size = 0x12000, scoped, tag = 'internal scratch']
  %s0 = inlined_call_operand.vmem [shape: f32[8,1], index: 0, kind: input, shape index: {}]
  %s1 = inlined_call_operand.hbm [shape: f32[1,10], index: 1, kind: input, shape index: {}]
  %s2 = inlined_call_operand.hbm [shape: f32[10,1000], index: 2, kind: input, shape index: {}]
  %s3 = inlined_call_operand.hbm [shape: f32[1,1000], index: 3, kind: input, shape index: {}]
  %s4 = inlined_call_operand.hbm [shape: f32[1,1000], index: 4, kind: input, shape index: {}]
  %s5 = inlined_call_operand.hbm [shape: f32[1,1000], index: 5, kind: input, shape index: {}]
  %s6 = inlined_call_operand.hbm [shape: f32[1000,2560], index: 6, kind: input, shape index: {}]
  %s7 = inlined_call_operand.vmem [shape: f32[8,2560], index: 7, kind: output, shape index: {}]
  %s8 = sld [smem:[#allocation0]]
  $region85: #{mlp_forward.1} parent=0
    _
  %s10 = ssub.s32 1, %s8
  %s11 = scalar_select 0, %s10, %s8
  $region1: #{mlp_forward.1} parent=0
    #allocation2 [shape = 'u8[512]{0}', space=vmem, size = 0x400, scoped, tag = 'input window, operand 1, single buffered']
    #allocation3 [shape = 's32[2]{0}', space=sflag, size = 0x8, scoped, tag = 'scoped memory for mlp_forward.1']
    #allocation4 [shape = 'u8[65536]{0}', space=vmem, size = 0x10000, scoped, tag = 'input window, operand 2, single buffered']
    #allocation5 [shape = 's32[1]{0}', space=sflag, size = 0x4, scoped, tag = 'scoped memory for mlp_forward.1']
    #allocation6 [shape = 'u8[4096]{0}', space=vmem, size = 0x1000, scoped, tag = 'input window, operand 3, single buffered']
    #allocation7 [shape = 'u8[4096]{0}', space=vmem, size = 0x1000, scoped, tag = 'input window, operand 4, single buffered']
    #allocation8 [shape = 's32[1]{0}', space=sflag, size = 0x4, scoped, tag = 'scoped memory for mlp_forward.1']
    #allocation9 [shape = 'u8[4096]{0}', space=vmem, size = 0x1000, scoped, tag = 'input window, operand 5, single buffered']
    #allocation10 [shape = 'u8[5120000]{0}', space=vmem, size = 0x4e2000, scoped, tag = 'input window, operand 6']
    #allocation11 [shape = 's32[2]{0}', space=sflag, size = 0x8, scoped, tag = 'scoped memory for mlp_forward.1']
    %12 = vsyncpa [#allocation3], 0
    %13 = vsyncpa [#allocation5], 0
    %14 = vsyncpa [#allocation8], 0
    %15 = vsyncpa [#allocation11], 0
    %s16 = scalar_lea.sflag [#allocation11], 1
    %17 = vsyncpa %s16, 0
    loop: start=0, step=1, limit=6
    $region2: #{mlp_forward.1} parent=1 // loop_pre_header
      _
    $region3: #{mlp_forward.1} parent=1 // loop_header
      %s19 = sphi 0, %s23
      %p20 = scmp.ge.s32.totalorder %s19, 6
      %s27 = sphi 0, %s27
      %s29 = sphi 0, %s27
      %s30 = sphi 0, %s29
      %s44 = sphi 0, %s30
      %s48 = sphi 0, %s48
      %s50 = sphi 0, %s48
      %s51 = sphi 0, %s50
      %s65 = sphi 0, %s51
      %s69 = sphi 0, %s69
      %s71 = sphi 0, %s69
      %s72 = sphi 0, %s71
      %s86 = sphi 0, %s72
      %s90 = sphi 0, %s90
      %s92 = sphi 0, %s90
      %s93 = sphi 0, %s92
      %s107 = sphi 0, %s93
      %s111 = sphi 0, %s111
      %s113 = sphi 0, %s111
      %s114 = sphi 0, %s113
      %s128 = sphi 0, %s114
      %s132 = sphi 0, %s132
      %s134 = sphi 0, %s132
      %s135 = sphi 0, %s134
      %s149 = sphi 0, %s135
      %s155 = sphi 0, %s157
      %s158 = sphi 0, %s155
      %s159 = sphi 0, %s158
      %s175 = sphi 0, %s159
      %s181 = sphi 0, %s183
      %s184 = sphi 0, %s181
      %s185 = sphi 0, %s184
      %s201 = sphi 0, %s185
    $region4: #{mlp_forward.1} parent=1 // loop_header_branch
      %22 = sbr.rel (%p20) target = $region8
    $region5: #{mlp_forward.1} parent=1 // loop_body
      %s24 = ssub.s32 %s19, 1
      %s25 = ssub.s32 %s19, 2
      %s26 = sadd.s32 %s19, 1
      %s28 = sadd.s32 %s27, 1
      %p31 = scmp.eq.s32.totalorder %s19, 3
      %p32 = scmp.ne.s32.totalorder %s27, %s29
      %p33 = scmp.eq.s32.totalorder %s19, 0
      %p34 = por %p32, %p33
      %p35 = scmp.ne.s32.totalorder %s27, %s29
      %p36 = scmp.eq.s32.totalorder %s24, 3
      %p37 = por %p35, %p36
      %p38 = scmp.ne.s32.totalorder %s29, %s30
      %p39 = scmp.eq.s32.totalorder %s24, 0
      %p40 = por %p38, %p39
      %p41 = scmp.ne.s32.totalorder %s29, %s30
      %p42 = scmp.eq.s32.totalorder %s25, 3
      %p43 = por %p41, %p42
      %p45 = scmp.ne.s32.totalorder %s30, %s44
      %p46 = scmp.eq.s32.totalorder %s25, 0
      %p47 = por %p45, %p46
      %s49 = sadd.s32 %s48, 1
      %p52 = scmp.eq.s32.totalorder %s19, 3
      %p53 = scmp.ne.s32.totalorder %s48, %s50
      %p54 = scmp.eq.s32.totalorder %s19, 0
      %p55 = por %p53, %p54
      %p56 = scmp.ne.s32.totalorder %s48, %s50
      %p57 = scmp.eq.s32.totalorder %s24, 3
      %p58 = por %p56, %p57
      %p59 = scmp.ne.s32.totalorder %s50, %s51
      %p60 = scmp.eq.s32.totalorder %s24, 0
      %p61 = por %p59, %p60
      %p62 = scmp.ne.s32.totalorder %s50, %s51
      %p63 = scmp.eq.s32.totalorder %s25, 3
      %p64 = por %p62, %p63
      %p66 = scmp.ne.s32.totalorder %s51, %s65
      %p67 = scmp.eq.s32.totalorder %s25, 0
      %p68 = por %p66, %p67
      %s70 = sadd.s32 %s69, 1
      %p73 = scmp.eq.s32.totalorder %s19, 3
      %p74 = scmp.ne.s32.totalorder %s69, %s71
      %p75 = scmp.eq.s32.totalorder %s19, 0
      %p76 = por %p74, %p75
      %p77 = scmp.ne.s32.totalorder %s69, %s71
      %p78 = scmp.eq.s32.totalorder %s24, 3
      %p79 = por %p77, %p78
      %p80 = scmp.ne.s32.totalorder %s71, %s72
      %p81 = scmp.eq.s32.totalorder %s24, 0
      %p82 = por %p80, %p81
      %p83 = scmp.ne.s32.totalorder %s71, %s72
      %p84 = scmp.eq.s32.totalorder %s25, 3
      %p85 = por %p83, %p84
      %p87 = scmp.ne.s32.totalorder %s72, %s86
      %p88 = scmp.eq.s32.totalorder %s25, 0
      %p89 = por %p87, %p88
      %s91 = sadd.s32 %s90, 1
      %p94 = scmp.eq.s32.totalorder %s19, 3
      %p95 = scmp.ne.s32.totalorder %s90, %s92
      %p96 = scmp.eq.s32.totalorder %s19, 0
      %p97 = por %p95, %p96
      %p98 = scmp.ne.s32.totalorder %s90, %s92
      %p99 = scmp.eq.s32.totalorder %s24, 3
      %p100 = por %p98, %p99
      %p101 = scmp.ne.s32.totalorder %s92, %s93
      %p102 = scmp.eq.s32.totalorder %s24, 0
      %p103 = por %p101, %p102
      %p104 = scmp.ne.s32.totalorder %s92, %s93
      %p105 = scmp.eq.s32.totalorder %s25, 3
      %p106 = por %p104, %p105
      %p108 = scmp.ne.s32.totalorder %s93, %s107
      %p109 = scmp.eq.s32.totalorder %s25, 0
      %p110 = por %p108, %p109
      %s112 = sadd.s32 %s111, 1
      %p115 = scmp.eq.s32.totalorder %s19, 3
      %p116 = scmp.ne.s32.totalorder %s111, %s113
      %p117 = scmp.eq.s32.totalorder %s19, 0
      %p118 = por %p116, %p117
      %p119 = scmp.ne.s32.totalorder %s111, %s113
      %p120 = scmp.eq.s32.totalorder %s24, 3
      %p121 = por %p119, %p120
      %p122 = scmp.ne.s32.totalorder %s113, %s114
      %p123 = scmp.eq.s32.totalorder %s24, 0
      %p124 = por %p122, %p123
      %p125 = scmp.ne.s32.totalorder %s113, %s114
      %p126 = scmp.eq.s32.totalorder %s25, 3
      %p127 = por %p125, %p126
      %p129 = scmp.ne.s32.totalorder %s114, %s128
      %p130 = scmp.eq.s32.totalorder %s25, 0
      %p131 = por %p129, %p130
      %s133 = sadd.s32 %s132, 1
      %p136 = scmp.eq.s32.totalorder %s19, 3
      %p137 = scmp.ne.s32.totalorder %s132, %s134
      %p138 = scmp.eq.s32.totalorder %s19, 0
      %p139 = por %p137, %p138
      %p140 = scmp.ne.s32.totalorder %s132, %s134
      %p141 = scmp.eq.s32.totalorder %s24, 3
      %p142 = por %p140, %p141
      %p143 = scmp.ne.s32.totalorder %s134, %s135
      %p144 = scmp.eq.s32.totalorder %s24, 0
      %p145 = por %p143, %p144
      %p146 = scmp.ne.s32.totalorder %s134, %s135
      %p147 = scmp.eq.s32.totalorder %s25, 3
      %p148 = por %p146, %p147
      %p150 = scmp.ne.s32.totalorder %s135, %s149
      %p151 = scmp.eq.s32.totalorder %s25, 0
      %p152 = por %p150, %p151
      %s153 = ssub.s32 %s19, %s26
      %p154 = scmp.eq.s32.totalorder %s153, 0
      %s156 = sadd.s32 %s155, 1
      %s157 = scalar_select %p154, %s155, %s156
      %p160 = pneg %p154
      %p161 = scmp.eq.s32.totalorder %s19, 3
      %p162 = por %p160, %p161
      %p163 = scmp.ne.s32.totalorder %s155, %s158
      %p164 = scmp.eq.s32.totalorder %s19, 0
      %p165 = por %p163, %p164
      %p166 = scmp.ne.s32.totalorder %s155, %s158
      %p167 = scmp.eq.s32.totalorder %s24, 3
      %p168 = por %p166, %p167
      %p169 = scmp.ne.s32.totalorder %s158, %s159
      %p170 = scmp.eq.s32.totalorder %s24, 0
      %p171 = por %p169, %p170
      %p172 = scmp.ne.s32.totalorder %s158, %s159
      %p173 = scmp.eq.s32.totalorder %s25, 3
      %p174 = por %p172, %p173
      %p176 = scmp.ne.s32.totalorder %s159, %s175
      %p177 = scmp.eq.s32.totalorder %s25, 0
      %p178 = por %p176, %p177
      %s179 = ssub.s32 %s19, %s26
      %p180 = scmp.eq.s32.totalorder %s179, 0
      %s182 = sadd.s32 %s181, 1
      %s183 = scalar_select %p180, %s181, %s182
      %p186 = pneg %p180
      %p187 = scmp.eq.s32.totalorder %s19, 3
      %p188 = por %p186, %p187
      %p189 = scmp.ne.s32.totalorder %s181, %s184
      %p190 = scmp.eq.s32.totalorder %s19, 0
      %p191 = por %p189, %p190
      %p192 = scmp.ne.s32.totalorder %s181, %s184
      %p193 = scmp.eq.s32.totalorder %s24, 3
      %p194 = por %p192, %p193
      %p195 = scmp.ne.s32.totalorder %s184, %s185
      %p196 = scmp.eq.s32.totalorder %s24, 0
      %p197 = por %p195, %p196
      %p198 = scmp.ne.s32.totalorder %s184, %s185
      %p199 = scmp.eq.s32.totalorder %s25, 3
      %p200 = por %p198, %p199
      %p202 = scmp.ne.s32.totalorder %s185, %s201
      %p203 = scmp.eq.s32.totalorder %s25, 0
      %p204 = por %p202, %p203
      %p205 = scmp.le.s32.totalorder 1, %s19
      %p206 = scmp.lt.s32.totalorder %s19, 5
      %p207 = pnand %p205, %p206
      %p208 = pneg %p207
      // Predicated region
      $region9: #{mlp_forward.1} parent=5 // pred_check
        _
      $region10: #{mlp_forward.1} parent=5 // pred_check_branch
        %210 = sbr.rel (%p207) target = $region12
      $region11: #{mlp_forward.1} parent=5 // pred_region
        %s211 = ssub.s32 %s19, 1
        // Predicated region
        $region13: #{mlp_forward.1} parent=11 // pred_check
          %p212 = pneg %p40
        $region14: #{mlp_forward.1} parent=11 // pred_check_branch
          %214 = sbr.rel (%p212) target = $region16
        $region15: #{mlp_forward.1} parent=11 // pred_region
          _
        $region16: #{mlp_forward.1} parent=11 // pred_fallthru
          _
        // Predicated region
        $region17: #{mlp_forward.1} parent=11 // pred_check
          %p215 = pneg %p61
        $region18: #{mlp_forward.1} parent=11 // pred_check_branch
          %217 = sbr.rel (%p215) target = $region20
        $region19: #{mlp_forward.1} parent=11 // pred_region
          %s219 = ssub.s32 16, 16
          %220 = vsyncadd [#allocation3], %s219
          %s222 = sshll.u32 [#allocation2], 4
          %s223 = int_to_ptr.vmem [resolvable:$true] %s222
          %225 = dma.hbm_to_vmem [thread:$0]  %s1, 16, %s223, [#allocation3]
        $region20: #{mlp_forward.1} parent=11 // pred_fallthru
          _
        // Predicated region
        $region21: #{mlp_forward.1} parent=11 // pred_check
          %p226 = pneg %p82
        $region22: #{mlp_forward.1} parent=11 // pred_check_branch
          %228 = sbr.rel (%p226) target = $region24
        $region23: #{mlp_forward.1} parent=11 // pred_region
          %s230 = ssub.s32 2048, 2048
          %231 = vsyncadd [#allocation5], %s230
          %s232 = sshll.u32 [#allocation4], 4
          %s233 = int_to_ptr.vmem [resolvable:$true] %s232
          %238 = dma.hbm_to_vmem [thread:$0]  %s2, 2048, %s233, [#allocation5], 1024, 1024, 64
        $region24: #{mlp_forward.1} parent=11 // pred_fallthru
          _
        // Predicated region
        $region25: #{mlp_forward.1} parent=11 // pred_check
          %p239 = pneg %p103
        $region26: #{mlp_forward.1} parent=11 // pred_check_branch
          %241 = sbr.rel (%p239) target = $region28
        $region27: #{mlp_forward.1} parent=11 // pred_region
          %s243 = ssub.s32 128, 128
          %244 = vsyncadd [#allocation5], %s243
          %s246 = sshll.u32 [#allocation6], 4
          %s247 = int_to_ptr.vmem [resolvable:$true] %s246
          %249 = dma.hbm_to_vmem [thread:$0]  %s3, 128, %s247, [#allocation5]
        $region28: #{mlp_forward.1} parent=11 // pred_fallthru
          _
        // Predicated region
        $region29: #{mlp_forward.1} parent=11 // pred_check
          %p250 = pneg %p124
        $region30: #{mlp_forward.1} parent=11 // pred_check_branch
          %252 = sbr.rel (%p250) target = $region32
        $region31: #{mlp_forward.1} parent=11 // pred_region
          %s254 = ssub.s32 128, 128
          %255 = vsyncadd [#allocation8], %s254
          %s257 = sshll.u32 [#allocation7], 4
          %s258 = int_to_ptr.vmem [resolvable:$true] %s257
          %260 = dma.hbm_to_vmem [thread:$0]  %s4, 128, %s258, [#allocation8]
        $region32: #{mlp_forward.1} parent=11 // pred_fallthru
          _
        // Predicated region
        $region33: #{mlp_forward.1} parent=11 // pred_check
          %p261 = pneg %p145
        $region34: #{mlp_forward.1} parent=11 // pred_check_branch
          %263 = sbr.rel (%p261) target = $region36
        $region35: #{mlp_forward.1} parent=11 // pred_region
          %s265 = ssub.s32 128, 128
          %266 = vsyncadd [#allocation8], %s265
          %s268 = sshll.u32 [#allocation9], 4
          %s269 = int_to_ptr.vmem [resolvable:$true] %s268
          %271 = dma.hbm_to_vmem [thread:$0]  %s5, 128, %s269, [#allocation8]
        $region36: #{mlp_forward.1} parent=11 // pred_fallthru
          _
      $region12: #{mlp_forward.1} parent=5 // pred_fallthru
        _
      %p272 = scmp.lt.s32.totalorder %s19, 4
      // Predicated region
      $region37: #{mlp_forward.1} parent=5 // pred_check
        %p273 = pneg %p272
      $region38: #{mlp_forward.1} parent=5 // pred_check_branch
        %275 = sbr.rel (%p273) target = $region40
      $region39: #{mlp_forward.1} parent=5 // pred_region
        // Predicated region
        $region41: #{mlp_forward.1} parent=39 // pred_check
          %p276 = pneg %p165
        $region42: #{mlp_forward.1} parent=39 // pred_check_branch
          %278 = sbr.rel (%p276) target = $region44
        $region43: #{mlp_forward.1} parent=39 // pred_region
          %s279 = sand.u32 %s155, 1
          %s280 = scalar_lea.sflag [#allocation11], %s279
          %s281 = sand.u32 %s155, 1
          %s282 = smul.addr %s281, 5000
          %s283 = scalar_lea.vmem [#allocation10], %s282
          %s284 = smul.u32 5, %s19
          %s286 = ssub.s32 80000, 80000
          %287 = vsyncadd %s280, %s286
          %s288 = smul.addr %s284, 128
          %s289 = scalar_lea.hbm %s6, %s288
          %s290 = sshll.u32 %s283, 4
          %s291 = int_to_ptr.vmem [resolvable:$true] %s290
          %296 = dma.hbm_to_vmem [thread:$0]  %s289, 80000, %s291, %s280, 2560, 640, 40
        $region44: #{mlp_forward.1} parent=39 // pred_fallthru
          _
      $region40: #{mlp_forward.1} parent=5 // pred_fallthru
        _
      %p297 = scmp.le.s32.totalorder 1, %s19
      %p298 = scmp.lt.s32.totalorder %s19, 5
      %p299 = pnand %p297, %p298
      %p300 = pneg %p299
      // Predicated region
      $region45: #{mlp_forward.1} parent=5 // pred_check
        _
      $region46: #{mlp_forward.1} parent=5 // pred_check_branch
        %302 = sbr.rel (%p299) target = $region48
      $region47: #{mlp_forward.1} parent=5 // pred_region
        %s303 = ssub.s32 %s19, 1
        // Predicated region
        $region49: #{mlp_forward.1} parent=47 // pred_check
          %p304 = pneg %p61
        $region50: #{mlp_forward.1} parent=47 // pred_check_branch
          %306 = sbr.rel (%p304) target = $region52
        $region51: #{mlp_forward.1} parent=47 // pred_region
          %307 = dma.done [#allocation3], 16
        $region52: #{mlp_forward.1} parent=47 // pred_fallthru
          _
        // Predicated region
        $region53: #{mlp_forward.1} parent=47 // pred_check
          %p308 = pneg %p82
        $region54: #{mlp_forward.1} parent=47 // pred_check_branch
          %310 = sbr.rel (%p308) target = $region56
        $region55: #{mlp_forward.1} parent=47 // pred_region
          %311 = dma.done [#allocation5], 2048
        $region56: #{mlp_forward.1} parent=47 // pred_fallthru
          _
        // Predicated region
        $region57: #{mlp_forward.1} parent=47 // pred_check
          %p312 = pneg %p103
        $region58: #{mlp_forward.1} parent=47 // pred_check_branch
          %314 = sbr.rel (%p312) target = $region60
        $region59: #{mlp_forward.1} parent=47 // pred_region
          %315 = dma.done [#allocation5], 128
        $region60: #{mlp_forward.1} parent=47 // pred_fallthru
          _
        // Predicated region
        $region61: #{mlp_forward.1} parent=47 // pred_check
          %p316 = pneg %p124
        $region62: #{mlp_forward.1} parent=47 // pred_check_branch
          %318 = sbr.rel (%p316) target = $region64
        $region63: #{mlp_forward.1} parent=47 // pred_region
          %319 = dma.done [#allocation8], 128
        $region64: #{mlp_forward.1} parent=47 // pred_fallthru
          _
        // Predicated region
        $region65: #{mlp_forward.1} parent=47 // pred_check
          %p320 = pneg %p145
        $region66: #{mlp_forward.1} parent=47 // pred_check_branch
          %322 = sbr.rel (%p320) target = $region68
        $region67: #{mlp_forward.1} parent=47 // pred_region
          %323 = dma.done [#allocation8], 128
        $region68: #{mlp_forward.1} parent=47 // pred_fallthru
          _
        %s324 = sand.u32 %s158, 1
        %s325 = scalar_lea.sflag [#allocation11], %s324
        %s326 = sand.u32 %s158, 1
        %s327 = smul.addr %s326, 5000
        %s328 = scalar_lea.vmem [#allocation10], %s327
        // Predicated region
        $region69: #{mlp_forward.1} parent=47 // pred_check
          %p329 = pneg %p171
        $region70: #{mlp_forward.1} parent=47 // pred_check_branch
          %331 = sbr.rel (%p329) target = $region72
        $region71: #{mlp_forward.1} parent=47 // pred_region
          %332 = dma.done %s325, 80000
        $region72: #{mlp_forward.1} parent=47 // pred_fallthru
          _
        %p333 = pneg %p40
        %p334 = pneg %p37
        %p335 = pneg %p61
        %p336 = pneg %p58
        %p337 = pneg %p82
        %p338 = pneg %p79
        %p339 = pneg %p103
        %p340 = pneg %p100
        %p341 = pneg %p124
        %p342 = pneg %p121
        %p343 = pneg %p145
        %p344 = pneg %p142
        %s345 = sand.u32 %s158, 1
        %s346 = scalar_lea.sflag [#allocation11], %s345
        %s347 = sand.u32 %s158, 1
        %s348 = smul.addr %s347, 5000
        %s349 = scalar_lea.vmem [#allocation10], %s348
        %p350 = pneg %p171
        %p351 = pneg %p168
        %p352 = pneg %p197
        %p353 = pneg %p194
        %s354 = smul.u32 5, %s24
        %p355 = scmp.lt.s32.totalorder %s354, 19
        %s356 = scalar_select %p355, %s354, 19
        %s357 = smul.addr %s356, 8
        %s358 = scalar_lea.vmem %s7, %s357
        %s359 = smul.u32 5, %s24
        %s360 = smul.u32 5, %s24
        %p361 = scmp.lt.s32.totalorder %s360, 19
        %s362 = scalar_select %p361, %s360, 19
        %s363 = smul.addr %s362, 8
        %s364 = scalar_lea.vmem %s7, %s363
        %s365 = smul.u32 5, %s24
        %v366 = vld [vmem:[%s0] sm:$0xff]
        %v367 = vld [vmem:[#allocation2] sm:$0x1]
        %369 = vset.pattern.permute.xlu0 0
        %370 = vperm.xlu0 %369, %v366
        %v371 = vpop.permute.xlu0 %370
        %v374 = vlaneseq
        %v375 = vshrl.u32 %v374, 7
        %v376 = vsub.s32 0, %v375
        %v377 = vrot.slane %v367, %v376
        %v379 = vmul.f32 %v371, %v377
        %v380 = vtanh.pop %v379
        %v381 = vld [vmem:[#allocation4] sm:$0xff]
        %v382 = vld [vmem:[#allocation4 + $0x8] sm:$0xff]
        %v383 = vld [vmem:[#allocation4 + $0x10] sm:$0xff]
        %v384 = vld [vmem:[#allocation4 + $0x18] sm:$0xff]
        %v385 = vld [vmem:[#allocation4 + $0x20] sm:$0xff]
        %v386 = vld [vmem:[#allocation4 + $0x28] sm:$0xff]
        %v387 = vld [vmem:[#allocation4 + $0x30] sm:$0xff]
        %v388 = vld [vmem:[#allocation4 + $0x38] sm:$0xff]
        %v389 = vld [vmem:[#allocation4 + $0x40] sm:$0x3]
        %v390 = vld [vmem:[#allocation4 + $0x48] sm:$0x3]
        %v391 = vld [vmem:[#allocation4 + $0x50] sm:$0x3]
        %v392 = vld [vmem:[#allocation4 + $0x58] sm:$0x3]
        %v393 = vld [vmem:[#allocation4 + $0x60] sm:$0x3]
        %v394 = vld [vmem:[#allocation4 + $0x68] sm:$0x3]
        %v395 = vld [vmem:[#allocation4 + $0x70] sm:$0x3]
        %v396 = vld [vmem:[#allocation4 + $0x78] sm:$0x3]
        %v397 = vld [vmem:[#allocation6] sm:$0xff]
        %v399 = vlaneseq
        %v400 = vshrl.u32 %v399, 7
        %v401 = vsub.s32 0, %v400
        %v402 = vrot.slane %v397, %v401
        %v403 = vlaneseq
        %v404 = vshrl.u32 %v403, 7
        %v405 = vsub.s32 1, %v404
        %v406 = vrot.slane %v397, %v405
        %v407 = vlaneseq
        %v408 = vshrl.u32 %v407, 7
        %v409 = vsub.s32 2, %v408
        %v410 = vrot.slane %v397, %v409
        %v411 = vlaneseq
        %v412 = vshrl.u32 %v411, 7
        %v413 = vsub.s32 3, %v412
        %v414 = vrot.slane %v397, %v413
        %v415 = vlaneseq
        %v416 = vshrl.u32 %v415, 7
        %v417 = vsub.s32 4, %v416
        %v418 = vrot.slane %v397, %v417
        %v419 = vlaneseq
        %v420 = vshrl.u32 %v419, 7
        %v421 = vsub.s32 5, %v420
        %v422 = vrot.slane %v397, %v421
        %v423 = vlaneseq
        %v424 = vshrl.u32 %v423, 7
        %v425 = vsub.s32 6, %v424
        %v426 = vrot.slane %v397, %v425
        %v427 = vlaneseq
        %v428 = vshrl.u32 %v427, 7
        %v429 = vsub.s32 7, %v428
        %v430 = vrot.slane %v397, %v429
        %vm439 = vcmask 80896
        %v441 = vsel %vm439, %v380, 0
        %vm443 = vcmask 1041408
        %v445 = vsel %vm443, %v389, 0
        %v448 = vsel %vm443, %v390, 0
        %v451 = vsel %vm443, %v391, 0
        %v454 = vsel %vm443, %v392, 0
        %v457 = vsel %vm443, %v393, 0
        %v460 = vsel %vm443, %v394, 0
        %v463 = vsel %vm443, %v395, 0
        %v466 = vsel %vm443, %v396, 0
        %468 = vmatprep.subr.mxu0 %v382
        %469 = vmatpush1.msra.mxu0 %v381
        %470 = vmatprep.subr.mxu0 %v448
        %471 = vmatpush1.msra.mxu0 %v445
        %472 = vmatprep.subr.mxu0 0.0
        %473 = vmatpush1.msra.mxu0 0.0
        %474 = vmatprep.subr.mxu0 0.0
        %475 = vmatpush1.msra.mxu0 0.0
        %476 = vmatprep.subr.mxu0 0.0
        %477 = vmatpush1.msra.mxu0 0.0
        %478 = vmatprep.subr.mxu0 0.0
        %479 = vmatpush1.msra.mxu0 0.0
        %480 = vmatprep.subr.mxu0 0.0
        %481 = vmatpush1.msra.mxu0 0.0
        %482 = vmatprep.subr.mxu0 0.0
        %483 = vmatpush1.msra.mxu0 0.0
        %484 = vmatprep.subr.mxu0 0.0
        %485 = vmatpush1.msra.mxu0 0.0
        %486 = vmatprep.subr.mxu0 0.0
        %487 = vmatpush1.msra.mxu0 0.0
        %488 = vmatprep.subr.mxu0 0.0
        %489 = vmatpush1.msra.mxu0 0.0
        %490 = vmatprep.subr.mxu0 0.0
        %491 = vmatpush1.msra.mxu0 0.0
        %492 = vmatprep.subr.mxu0 0.0
        %493 = vmatpush1.msra.mxu0 0.0
        %494 = vmatprep.subr.mxu0 0.0
        %495 = vmatpush1.msra.mxu0 0.0
        %496 = vmatprep.subr.mxu0 0.0
        %497 = vmatpush1.msra.mxu0 0.0
        %498 = vmatprep.subr.mxu0 0.0
        %499 = vmatpush1.msra.mxu0 0.0
        %500 = vmatprep.subr.mxu0 0.0
        %501 = vmatpush1.msra.mxu0 0.0
        %502 = vmatprep.subr.mxu0 0.0
        %503 = vmatpush1.msra.mxu0 0.0
        %504 = vmatprep.subr.mxu0 0.0
        %505 = vmatpush1.msra.mxu0 0.0
        %506 = vmatprep.subr.mxu0 0.0
        %507 = vmatpush1.msra.mxu0 0.0
        %508 = vmatprep.subr.mxu0 0.0
        %509 = vmatpush1.msra.mxu0 0.0
        %510 = vmatprep.subr.mxu0 0.0
        %511 = vmatpush1.msra.mxu0 0.0
        %512 = vmatprep.subr.mxu0 0.0
        %513 = vmatpush1.msra.mxu0 0.0
        %514 = vmatprep.subr.mxu0 0.0
        %515 = vmatpush1.msra.mxu0 0.0
        %516 = vmatprep.subr.mxu0 0.0
        %517 = vmatpush1.msra.mxu0 0.0
        %518 = vmatprep.subr.mxu0 0.0
        %519 = vmatpush1.msra.mxu0 0.0
        %520 = vmatprep.subr.mxu0 0.0
        %521 = vmatpush1.msra.mxu0 0.0
        %522 = vmatprep.subr.mxu0 0.0
        %523 = vmatpush1.msra.mxu0 0.0
        %524 = vmatprep.subr.mxu0 0.0
        %525 = vmatpush1.msra.mxu0 0.0
        %526 = vmatprep.subr.mxu0 0.0
        %527 = vmatpush1.msra.mxu0 0.0
        %528 = vmatprep.subr.mxu0 0.0
        %529 = vmatpush1.msra.mxu0 0.0
        %530 = vmatprep.subr.mxu0 0.0
        %531 = vmatpush1.msra.mxu0 0.0
        %532 = vmatprep.mubr.f32.mxu0 0.0
        %533 = vmatmul.mubr.f32.gmra.mrb[0].mxu0 %v441
        %v534 = vpop.f32.mrb[0].mxu0
        %v535 = vadd.f32 %v402, %v534
        %v536 = vpop.f32.mrb[0].mxu0
        %v537 = vadd.f32 %v406, %v536
        %538 = vdwg.mxu0
        %539 = vmatprep.subr.mxu0 %v384
        %540 = vmatpush1.msra.mxu0 %v383
        %541 = vmatprep.subr.mxu0 %v454
        %542 = vmatpush1.msra.mxu0 %v451
        %543 = vmatprep.subr.mxu0 0.0
        %544 = vmatpush1.msra.mxu0 0.0
        %545 = vmatprep.subr.mxu0 0.0
        %546 = vmatpush1.msra.mxu0 0.0
        %547 = vmatprep.subr.mxu0 0.0
        %548 = vmatpush1.msra.mxu0 0.0
        %549 = vmatprep.subr.mxu0 0.0
        %550 = vmatpush1.msra.mxu0 0.0
        %551 = vmatprep.subr.mxu0 0.0
        %552 = vmatpush1.msra.mxu0 0.0
        %553 = vmatprep.subr.mxu0 0.0
        %554 = vmatpush1.msra.mxu0 0.0
        %555 = vmatprep.subr.mxu0 0.0
        %556 = vmatpush1.msra.mxu0 0.0
        %557 = vmatprep.subr.mxu0 0.0
        %558 = vmatpush1.msra.mxu0 0.0
        %559 = vmatprep.subr.mxu0 0.0
        %560 = vmatpush1.msra.mxu0 0.0
        %561 = vmatprep.subr.mxu0 0.0
        %562 = vmatpush1.msra.mxu0 0.0
        %563 = vmatprep.subr.mxu0 0.0
        %564 = vmatpush1.msra.mxu0 0.0
        %565 = vmatprep.subr.mxu0 0.0
        %566 = vmatpush1.msra.mxu0 0.0
        %567 = vmatprep.subr.mxu0 0.0
        %568 = vmatpush1.msra.mxu0 0.0
        %569 = vmatprep.subr.mxu0 0.0
        %570 = vmatpush1.msra.mxu0 0.0
        %571 = vmatprep.subr.mxu0 0.0
        %572 = vmatpush1.msra.mxu0 0.0
        %573 = vmatprep.subr.mxu0 0.0
        %574 = vmatpush1.msra.mxu0 0.0
        %575 = vmatprep.subr.mxu0 0.0
        %576 = vmatpush1.msra.mxu0 0.0
        %577 = vmatprep.subr.mxu0 0.0
        %578 = vmatpush1.msra.mxu0 0.0
        %579 = vmatprep.subr.mxu0 0.0
        %580 = vmatpush1.msra.mxu0 0.0
        %581 = vmatprep.subr.mxu0 0.0
        %582 = vmatpush1.msra.mxu0 0.0
        %583 = vmatprep.subr.mxu0 0.0
        %584 = vmatpush1.msra.mxu0 0.0
        %585 = vmatprep.subr.mxu0 0.0
        %586 = vmatpush1.msra.mxu0 0.0
        %587 = vmatprep.subr.mxu0 0.0
        %588 = vmatpush1.msra.mxu0 0.0
        %589 = vmatprep.subr.mxu0 0.0
        %590 = vmatpush1.msra.mxu0 0.0
        %591 = vmatprep.subr.mxu0 0.0
        %592 = vmatpush1.msra.mxu0 0.0
        %593 = vmatprep.subr.mxu0 0.0
        %594 = vmatpush1.msra.mxu0 0.0
        %595 = vmatprep.subr.mxu0 0.0
        %596 = vmatpush1.msra.mxu0 0.0
        %597 = vmatprep.subr.mxu0 0.0
        %598 = vmatpush1.msra.mxu0 0.0
        %599 = vmatprep.subr.mxu0 0.0
        %600 = vmatpush1.msra.mxu0 0.0
        %601 = vmatprep.subr.mxu0 0.0
        %602 = vmatpush1.msra.mxu0 0.0
        %603 = vmatprep.mubr.f32.mxu0 0.0
        %604 = vmatmul.mubr.f32.gmra.mrb[0].mxu0 %v441
        %v605 = vpop.f32.mrb[0].mxu0
        %v606 = vadd.f32 %v410, %v605
        %v607 = vpop.f32.mrb[0].mxu0
        %v608 = vadd.f32 %v414, %v607
        %609 = vdwg.mxu0
        %610 = vmatprep.subr.mxu0 %v386
        %611 = vmatpush1.msra.mxu0 %v385
        %612 = vmatprep.subr.mxu0 %v460
        %613 = vmatpush1.msra.mxu0 %v457
        %614 = vmatprep.subr.mxu0 0.0
        %615 = vmatpush1.msra.mxu0 0.0
        %616 = vmatprep.subr.mxu0 0.0
        %617 = vmatpush1.msra.mxu0 0.0
        %618 = vmatprep.subr.mxu0 0.0
        %619 = vmatpush1.msra.mxu0 0.0
        %620 = vmatprep.subr.mxu0 0.0
        %621 = vmatpush1.msra.mxu0 0.0
        %622 = vmatprep.subr.mxu0 0.0
        %623 = vmatpush1.msra.mxu0 0.0
        %624 = vmatprep.subr.mxu0 0.0
        %625 = vmatpush1.msra.mxu0 0.0
        %626 = vmatprep.subr.mxu0 0.0
        %627 = vmatpush1.msra.mxu0 0.0
        %628 = vmatprep.subr.mxu0 0.0
        %629 = vmatpush1.msra.mxu0 0.0
        %630 = vmatprep.subr.mxu0 0.0
        %631 = vmatpush1.msra.mxu0 0.0
        %632 = vmatprep.subr.mxu0 0.0
        %633 = vmatpush1.msra.mxu0 0.0
        %634 = vmatprep.subr.mxu0 0.0
        %635 = vmatpush1.msra.mxu0 0.0
        %636 = vmatprep.subr.mxu0 0.0
        %637 = vmatpush1.msra.mxu0 0.0
        %638 = vmatprep.subr.mxu0 0.0
        %639 = vmatpush1.msra.mxu0 0.0
        %640 = vmatprep.subr.mxu0 0.0
        %641 = vmatpush1.msra.mxu0 0.0
        %642 = vmatprep.subr.mxu0 0.0
        %643 = vmatpush1.msra.mxu0 0.0
        %644 = vmatprep.subr.mxu0 0.0
        %645 = vmatpush1.msra.mxu0 0.0
        %646 = vmatprep.subr.mxu0 0.0
        %647 = vmatpush1.msra.mxu0 0.0
        %648 = vmatprep.subr.mxu0 0.0
        %649 = vmatpush1.msra.mxu0 0.0
        %650 = vmatprep.subr.mxu0 0.0
        %651 = vmatpush1.msra.mxu0 0.0
        %652 = vmatprep.subr.mxu0 0.0
        %653 = vmatpush1.msra.mxu0 0.0
        %654 = vmatprep.subr.mxu0 0.0
        %655 = vmatpush1.msra.mxu0 0.0
        %656 = vmatprep.subr.mxu0 0.0
        %657 = vmatpush1.msra.mxu0 0.0
        %658 = vmatprep.subr.mxu0 0.0
        %659 = vmatpush1.msra.mxu0 0.0
        %660 = vmatprep.subr.mxu0 0.0
        %661 = vmatpush1.msra.mxu0 0.0
        %662 = vmatprep.subr.mxu0 0.0
        %663 = vmatpush1.msra.mxu0 0.0
        %664 = vmatprep.subr.mxu0 0.0
        %665 = vmatpush1.msra.mxu0 0.0
        %666 = vmatprep.subr.mxu0 0.0
        %667 = vmatpush1.msra.mxu0 0.0
        %668 = vmatprep.subr.mxu0 0.0
        %669 = vmatpush1.msra.mxu0 0.0
        %670 = vmatprep.subr.mxu0 0.0
        %671 = vmatpush1.msra.mxu0 0.0
        %672 = vmatprep.subr.mxu0 0.0
        %673 = vmatpush1.msra.mxu0 0.0
        %674 = vmatprep.mubr.f32.mxu0 0.0
        %675 = vmatmul.mubr.f32.gmra.mrb[0].mxu0 %v441
        %v676 = vpop.f32.mrb[0].mxu0
        %v677 = vadd.f32 %v418, %v676
        %v678 = vpop.f32.mrb[0].mxu0
        %v679 = vadd.f32 %v422, %v678
        %680 = vdwg.mxu0
        %681 = vmatprep.subr.mxu0 %v388
        %682 = vmatpush1.msra.mxu0 %v387
        %683 = vmatprep.subr.mxu0 %v466
        %684 = vmatpush1.msra.mxu0 %v463
        %685 = vmatprep.subr.mxu0 0.0
        %686 = vmatpush1.msra.mxu0 0.0
        %687 = vmatprep.subr.mxu0 0.0
        %688 = vmatpush1.msra.mxu0 0.0
        %689 = vmatprep.subr.mxu0 0.0
        %690 = vmatpush1.msra.mxu0 0.0
        %691 = vmatprep.subr.mxu0 0.0
        %692 = vmatpush1.msra.mxu0 0.0
        %693 = vmatprep.subr.mxu0 0.0
        %694 = vmatpush1.msra.mxu0 0.0
        %695 = vmatprep.subr.mxu0 0.0
        %696 = vmatpush1.msra.mxu0 0.0
        %697 = vmatprep.subr.mxu0 0.0
        %698 = vmatpush1.msra.mxu0 0.0
        %699 = vmatprep.subr.mxu0 0.0
        %700 = vmatpush1.msra.mxu0 0.0
        %701 = vmatprep.subr.mxu0 0.0
        %702 = vmatpush1.msra.mxu0 0.0
        %703 = vmatprep.subr.mxu0 0.0
        %704 = vmatpush1.msra.mxu0 0.0
        %705 = vmatprep.subr.mxu0 0.0
        %706 = vmatpush1.msra.mxu0 0.0
        %707 = vmatprep.subr.mxu0 0.0
        %708 = vmatpush1.msra.mxu0 0.0
        %709 = vmatprep.subr.mxu0 0.0
        %710 = vmatpush1.msra.mxu0 0.0
        %711 = vmatprep.subr.mxu0 0.0
        %712 = vmatpush1.msra.mxu0 0.0
        %713 = vmatprep.subr.mxu0 0.0
        %714 = vmatpush1.msra.mxu0 0.0
        %715 = vmatprep.subr.mxu0 0.0
        %716 = vmatpush1.msra.mxu0 0.0
        %717 = vmatprep.subr.mxu0 0.0
        %718 = vmatpush1.msra.mxu0 0.0
        %719 = vmatprep.subr.mxu0 0.0
        %720 = vmatpush1.msra.mxu0 0.0
        %721 = vmatprep.subr.mxu0 0.0
        %722 = vmatpush1.msra.mxu0 0.0
        %723 = vmatprep.subr.mxu0 0.0
        %724 = vmatpush1.msra.mxu0 0.0
        %725 = vmatprep.subr.mxu0 0.0
        %726 = vmatpush1.msra.mxu0 0.0
        %727 = vmatprep.subr.mxu0 0.0
        %728 = vmatpush1.msra.mxu0 0.0
        %729 = vmatprep.subr.mxu0 0.0
        %730 = vmatpush1.msra.mxu0 0.0
        %731 = vmatprep.subr.mxu0 0.0
        %732 = vmatpush1.msra.mxu0 0.0
        %733 = vmatprep.subr.mxu0 0.0
        %734 = vmatpush1.msra.mxu0 0.0
        %735 = vmatprep.subr.mxu0 0.0
        %736 = vmatpush1.msra.mxu0 0.0
        %737 = vmatprep.subr.mxu0 0.0
        %738 = vmatpush1.msra.mxu0 0.0
        %739 = vmatprep.subr.mxu0 0.0
        %740 = vmatpush1.msra.mxu0 0.0
        %741 = vmatprep.subr.mxu0 0.0
        %742 = vmatpush1.msra.mxu0 0.0
        %743 = vmatprep.subr.mxu0 0.0
        %744 = vmatpush1.msra.mxu0 0.0
        %745 = vmatprep.mubr.f32.mxu0 0.0
        %746 = vmatmul.mubr.f32.gmra.mrb[0].mxu0 %v441
        %v747 = vpop.f32.mrb[0].mxu0
        %v748 = vadd.f32 %v426, %v747
        %v749 = vpop.f32.mrb[0].mxu0
        %v750 = vadd.f32 %v430, %v749
        %751 = vdwg.mxu0
        %v752 = vtanh.pop %v535
        %v753 = vtanh.pop %v537
        %v754 = vtanh.pop %v606
        %v755 = vtanh.pop %v608
        %v756 = vtanh.pop %v677
        %v757 = vtanh.pop %v679
        %v758 = vtanh.pop %v748
        %v759 = vtanh.pop %v750
        %v760 = vrot.slane %v752, 4
        %v761 = vadd.f32 %v752, %v760
        %v762 = vrot.slane %v761, 2
        %v763 = vadd.f32 %v761, %v762
        %v764 = vrot.slane %v763, 1
        %v765 = vadd.f32 %v763, %v764
        %v766 = vrot.slane %v753, 4
        %v767 = vadd.f32 %v753, %v766
        %v768 = vrot.slane %v767, 2
        %v769 = vadd.f32 %v767, %v768
        %v770 = vrot.slane %v769, 1
        %v771 = vadd.f32 %v769, %v770
        %v772 = vrot.slane %v754, 4
        %v773 = vadd.f32 %v754, %v772
        %v774 = vrot.slane %v773, 2
        %v775 = vadd.f32 %v773, %v774
        %v776 = vrot.slane %v775, 1
        %v777 = vadd.f32 %v775, %v776
        %v778 = vrot.slane %v755, 4
        %v779 = vadd.f32 %v755, %v778
        %v780 = vrot.slane %v779, 2
        %v781 = vadd.f32 %v779, %v780
        %v782 = vrot.slane %v781, 1
        %v783 = vadd.f32 %v781, %v782
        %v784 = vrot.slane %v756, 4
        %v785 = vadd.f32 %v756, %v784
        %v786 = vrot.slane %v785, 2
        %v787 = vadd.f32 %v785, %v786
        %v788 = vrot.slane %v787, 1
        %v789 = vadd.f32 %v787, %v788
        %v790 = vrot.slane %v757, 4
        %v791 = vadd.f32 %v757, %v790
        %v792 = vrot.slane %v791, 2
        %v793 = vadd.f32 %v791, %v792
        %v794 = vrot.slane %v793, 1
        %v795 = vadd.f32 %v793, %v794
        %v796 = vrot.slane %v758, 4
        %v797 = vadd.f32 %v758, %v796
        %v798 = vrot.slane %v797, 2
        %v799 = vadd.f32 %v797, %v798
        %v800 = vrot.slane %v799, 1
        %v801 = vadd.f32 %v799, %v800
        %vm802 = vcmask 850944
        %v803 = vsel %vm802, %v759, 0.0
        %v804 = vrot.slane %v803, 4
        %v805 = vadd.f32 %v803, %v804
        %v806 = vrot.slane %v805, 2
        %v807 = vadd.f32 %v805, %v806
        %v808 = vrot.slane %v807, 1
        %v809 = vadd.f32 %v807, %v808
        %v810 = vrcp.pop 8.0
        %v811 = vmul.f32 %v765, %v810
        %v812 = vmul.f32 %v771, %v810
        %v813 = vmul.f32 %v777, %v810
        %v814 = vmul.f32 %v783, %v810
        %v815 = vmul.f32 %v789, %v810
        %v816 = vmul.f32 %v795, %v810
        %v817 = vmul.f32 %v801, %v810
        %v818 = vmul.f32 %v809, %v810
        %v819 = vsub.f32 %v752, %v811
        %v820 = vsub.f32 %v753, %v812
        %v821 = vsub.f32 %v754, %v813
        %v822 = vsub.f32 %v755, %v814
        %v823 = vsub.f32 %v756, %v815
        %v824 = vsub.f32 %v757, %v816
        %v825 = vsub.f32 %v758, %v817
        %v826 = vsub.f32 %v759, %v818
        %v827 = vmul.f32 %v819, %v819
        %v828 = vmul.f32 %v820, %v820
        %v829 = vmul.f32 %v821, %v821
        %v830 = vmul.f32 %v822, %v822
        %v831 = vmul.f32 %v823, %v823
        %v832 = vmul.f32 %v824, %v824
        %v833 = vmul.f32 %v825, %v825
        %v834 = vmul.f32 %v826, %v826
        %v835 = vrot.slane %v827, 4
        %v836 = vadd.f32 %v827, %v835
        %v837 = vrot.slane %v836, 2
        %v838 = vadd.f32 %v836, %v837
        %v839 = vrot.slane %v838, 1
        %v840 = vadd.f32 %v838, %v839
        %v841 = vrot.slane %v828, 4
        %v842 = vadd.f32 %v828, %v841
        %v843 = vrot.slane %v842, 2
        %v844 = vadd.f32 %v842, %v843
        %v845 = vrot.slane %v844, 1
        %v846 = vadd.f32 %v844, %v845
        %v847 = vrot.slane %v829, 4
        %v848 = vadd.f32 %v829, %v847
        %v849 = vrot.slane %v848, 2
        %v850 = vadd.f32 %v848, %v849
        %v851 = vrot.slane %v850, 1
        %v852 = vadd.f32 %v850, %v851
        %v853 = vrot.slane %v830, 4
        %v854 = vadd.f32 %v830, %v853
        %v855 = vrot.slane %v854, 2
        %v856 = vadd.f32 %v854, %v855
        %v857 = vrot.slane %v856, 1
        %v858 = vadd.f32 %v856, %v857
        %v859 = vrot.slane %v831, 4
        %v860 = vadd.f32 %v831, %v859
        %v861 = vrot.slane %v860, 2
        %v862 = vadd.f32 %v860, %v861
        %v863 = vrot.slane %v862, 1
        %v864 = vadd.f32 %v862, %v863
        %v865 = vrot.slane %v832, 4
        %v866 = vadd.f32 %v832, %v865
        %v867 = vrot.slane %v866, 2
        %v868 = vadd.f32 %v866, %v867
        %v869 = vrot.slane %v868, 1
        %v870 = vadd.f32 %v868, %v869
        %v871 = vrot.slane %v833, 4
        %v872 = vadd.f32 %v833, %v871
        %v873 = vrot.slane %v872, 2
        %v874 = vadd.f32 %v872, %v873
        %v875 = vrot.slane %v874, 1
        %v876 = vadd.f32 %v874, %v875
        %v877 = vsel %vm802, %v834, 0.0
        %v878 = vrot.slane %v877, 4
        %v879 = vadd.f32 %v877, %v878
        %v880 = vrot.slane %v879, 2
        %v881 = vadd.f32 %v879, %v880
        %v882 = vrot.slane %v881, 1
        %v883 = vadd.f32 %v881, %v882
        %v884 = vmul.f32 %v840, %v810
        %v885 = vmul.f32 %v846, %v810
        %v886 = vmul.f32 %v852, %v810
        %v887 = vmul.f32 %v858, %v810
        %v888 = vmul.f32 %v864, %v810
        %v889 = vmul.f32 %v870, %v810
        %v890 = vmul.f32 %v876, %v810
        %v891 = vmul.f32 %v883, %v810
        %v892 = vadd.f32 %v884, 1e-05
        %v893 = vadd.f32 %v885, 1e-05
        %v894 = vadd.f32 %v886, 1e-05
        %v895 = vadd.f32 %v887, 1e-05
        %v896 = vadd.f32 %v888, 1e-05
        %v897 = vadd.f32 %v889, 1e-05
        %v898 = vadd.f32 %v890, 1e-05
        %v899 = vadd.f32 %v891, 1e-05
        %v900 = vrsqrt.pop %v892
        %v901 = vrsqrt.pop %v893
        %v902 = vrsqrt.pop %v894
        %v903 = vrsqrt.pop %v895
        %v904 = vrsqrt.pop %v896
        %v905 = vrsqrt.pop %v897
        %v906 = vrsqrt.pop %v898
        %v907 = vrsqrt.pop %v899
        %v908 = vmul.f32 %v819, %v900
        %v909 = vmul.f32 %v820, %v901
        %v910 = vmul.f32 %v821, %v902
        %v911 = vmul.f32 %v822, %v903
        %v912 = vmul.f32 %v823, %v904
        %v913 = vmul.f32 %v824, %v905
        %v914 = vmul.f32 %v825, %v906
        %v915 = vmul.f32 %v826, %v907
        %v916 = vld [vmem:[#allocation7] sm:$0xff]
        %v918 = vlaneseq
        %v919 = vshrl.u32 %v918, 7
        %v920 = vsub.s32 0, %v919
        %v921 = vrot.slane %v916, %v920
        %v922 = vlaneseq
        %v923 = vshrl.u32 %v922, 7
        %v924 = vsub.s32 1, %v923
        %v925 = vrot.slane %v916, %v924
        %v926 = vlaneseq
        %v927 = vshrl.u32 %v926, 7
        %v928 = vsub.s32 2, %v927
        %v929 = vrot.slane %v916, %v928
        %v930 = vlaneseq
        %v931 = vshrl.u32 %v930, 7
        %v932 = vsub.s32 3, %v931
        %v933 = vrot.slane %v916, %v932
        %v934 = vlaneseq
        %v935 = vshrl.u32 %v934, 7
        %v936 = vsub.s32 4, %v935
        %v937 = vrot.slane %v916, %v936
        %v938 = vlaneseq
        %v939 = vshrl.u32 %v938, 7
        %v940 = vsub.s32 5, %v939
        %v941 = vrot.slane %v916, %v940
        %v942 = vlaneseq
        %v943 = vshrl.u32 %v942, 7
        %v944 = vsub.s32 6, %v943
        %v945 = vrot.slane %v916, %v944
        %v946 = vlaneseq
        %v947 = vshrl.u32 %v946, 7
        %v948 = vsub.s32 7, %v947
        %v949 = vrot.slane %v916, %v948
        %v958 = vmul.f32 %v908, %v921
        %v959 = vmul.f32 %v909, %v925
        %v960 = vmul.f32 %v910, %v929
        %v961 = vmul.f32 %v911, %v933
        %v962 = vmul.f32 %v912, %v937
        %v963 = vmul.f32 %v913, %v941
        %v964 = vmul.f32 %v914, %v945
        %v965 = vmul.f32 %v915, %v949
        %v966 = vld [vmem:[#allocation9] sm:$0xff]
        %v968 = vlaneseq
        %v969 = vshrl.u32 %v968, 7
        %v970 = vsub.s32 0, %v969
        %v971 = vrot.slane %v966, %v970
        %v972 = vlaneseq
        %v973 = vshrl.u32 %v972, 7
        %v974 = vsub.s32 1, %v973
        %v975 = vrot.slane %v966, %v974
        %v976 = vlaneseq
        %v977 = vshrl.u32 %v976, 7
        %v978 = vsub.s32 2, %v977
        %v979 = vrot.slane %v966, %v978
        %v980 = vlaneseq
        %v981 = vshrl.u32 %v980, 7
        %v982 = vsub.s32 3, %v981
        %v983 = vrot.slane %v966, %v982
        %v984 = vlaneseq
        %v985 = vshrl.u32 %v984, 7
        %v986 = vsub.s32 4, %v985
        %v987 = vrot.slane %v966, %v986
        %v988 = vlaneseq
        %v989 = vshrl.u32 %v988, 7
        %v990 = vsub.s32 5, %v989
        %v991 = vrot.slane %v966, %v990
        %v992 = vlaneseq
        %v993 = vshrl.u32 %v992, 7
        %v994 = vsub.s32 6, %v993
        %v995 = vrot.slane %v966, %v994
        %v996 = vlaneseq
        %v997 = vshrl.u32 %v996, 7
        %v998 = vsub.s32 7, %v997
        %v999 = vrot.slane %v966, %v998
        %v1008 = vadd.f32 %v958, %v971
        %v1009 = vadd.f32 %v959, %v975
        %v1010 = vadd.f32 %v960, %v979
        %v1011 = vadd.f32 %v961, %v983
        %v1012 = vadd.f32 %v962, %v987
        %v1013 = vadd.f32 %v963, %v991
        %v1014 = vadd.f32 %v964, %v995
        %v1015 = vadd.f32 %v965, %v999
        %v1016 = vld [vmem:[%s328] sm:$0xff]
        %v1017 = vld [vmem:[%s328 + $0x8] sm:$0xff]
        %v1018 = vld [vmem:[%s328 + $0x10] sm:$0xff]
        %v1019 = vld [vmem:[%s328 + $0x18] sm:$0xff]
        %v1020 = vld [vmem:[%s328 + $0x20] sm:$0xff]
        %v1021 = vld [vmem:[%s328 + $0x28] sm:$0xff]
        %v1022 = vld [vmem:[%s328 + $0x30] sm:$0xff]
        %v1023 = vld [vmem:[%s328 + $0x38] sm:$0xff]
        %v1024 = vld [vmem:[%s328 + $0x40] sm:$0xff]
        %v1025 = vld [vmem:[%s328 + $0x48] sm:$0xff]
        %v1026 = vld [vmem:[%s328 + $0x50] sm:$0xff]
        %v1027 = vld [vmem:[%s328 + $0x58] sm:$0xff]
        %v1028 = vld [vmem:[%s328 + $0x60] sm:$0xff]
        %v1029 = vld [vmem:[%s328 + $0x68] sm:$0xff]
        %v1030 = vld [vmem:[%s328 + $0x70] sm:$0xff]
        %v1031 = vld [vmem:[%s328 + $0x78] sm:$0xff]
        %v1032 = vld [vmem:[%s328 + $0x80] sm:$0xff]
        %v1033 = vld [vmem:[%s328 + $0x88] sm:$0xff]
        %v1034 = vld [vmem:[%s328 + $0x90] sm:$0xff]
        %v1035 = vld [vmem:[%s328 + $0x98] sm:$0xff]
        %v1036 = vld [vmem:[%s328 + $0xa0] sm:$0xff]
        %v1037 = vld [vmem:[%s328 + $0xa8] sm:$0xff]
        %v1038 = vld [vmem:[%s328 + $0xb0] sm:$0xff]
        %v1039 = vld [vmem:[%s328 + $0xb8] sm:$0xff]
        %v1040 = vld [vmem:[%s328 + $0xc0] sm:$0xff]
        %v1041 = vld [vmem:[%s328 + $0xc8] sm:$0xff]
        %v1042 = vld [vmem:[%s328 + $0xd0] sm:$0xff]
        %v1043 = vld [vmem:[%s328 + $0xd8] sm:$0xff]
        %v1044 = vld [vmem:[%s328 + $0xe0] sm:$0xff]
        %v1045 = vld [vmem:[%s328 + $0xe8] sm:$0xff]
        %v1046 = vld [vmem:[%s328 + $0xf0] sm:$0xff]
        %v1047 = vld [vmem:[%s328 + $0xf8] sm:$0xff]
        %v1048 = vld [vmem:[%s328 + $0x100] sm:$0xff]
        %v1049 = vld [vmem:[%s328 + $0x108] sm:$0xff]
        %v1050 = vld [vmem:[%s328 + $0x110] sm:$0xff]
        %v1051 = vld [vmem:[%s328 + $0x118] sm:$0xff]
        %v1052 = vld [vmem:[%s328 + $0x120] sm:$0xff]
        %v1053 = vld [vmem:[%s328 + $0x128] sm:$0xff]
        %v1054 = vld [vmem:[%s328 + $0x130] sm:$0xff]
        %v1055 = vld [vmem:[%s328 + $0x138] sm:$0xff]
        %v1056 = vld [vmem:[%s328 + $0x140] sm:$0xff]
        %v1057 = vld [vmem:[%s328 + $0x148] sm:$0xff]
        %v1058 = vld [vmem:[%s328 + $0x150] sm:$0xff]
        %v1059 = vld [vmem:[%s328 + $0x158] sm:$0xff]
        %v1060 = vld [vmem:[%s328 + $0x160] sm:$0xff]
        %v1061 = vld [vmem:[%s328 + $0x168] sm:$0xff]
        %v1062 = vld [vmem:[%s328 + $0x170] sm:$0xff]
        %v1063 = vld [vmem:[%s328 + $0x178] sm:$0xff]
        %v1064 = vld [vmem:[%s328 + $0x180] sm:$0xff]
        %v1065 = vld [vmem:[%s328 + $0x188] sm:$0xff]
        %v1066 = vld [vmem:[%s328 + $0x190] sm:$0xff]
        %v1067 = vld [vmem:[%s328 + $0x198] sm:$0xff]
        %v1068 = vld [vmem:[%s328 + $0x1a0] sm:$0xff]
        %v1069 = vld [vmem:[%s328 + $0x1a8] sm:$0xff]
        %v1070 = vld [vmem:[%s328 + $0x1b0] sm:$0xff]
        %v1071 = vld [vmem:[%s328 + $0x1b8] sm:$0xff]
        %v1072 = vld [vmem:[%s328 + $0x1c0] sm:$0xff]
        %v1073 = vld [vmem:[%s328 + $0x1c8] sm:$0xff]
        %v1074 = vld [vmem:[%s328 + $0x1d0] sm:$0xff]
        %v1075 = vld [vmem:[%s328 + $0x1d8] sm:$0xff]
        %v1076 = vld [vmem:[%s328 + $0x1e0] sm:$0xff]
        %v1077 = vld [vmem:[%s328 + $0x1e8] sm:$0xff]
        %v1078 = vld [vmem:[%s328 + $0x1f0] sm:$0xff]
        %v1079 = vld [vmem:[%s328 + $0x1f8] sm:$0xff]
        %v1080 = vld [vmem:[%s328 + $0x200] sm:$0xff]
        %v1081 = vld [vmem:[%s328 + $0x208] sm:$0xff]
        %v1082 = vld [vmem:[%s328 + $0x210] sm:$0xff]
        %v1083 = vld [vmem:[%s328 + $0x218] sm:$0xff]
        %v1084 = vld [vmem:[%s328 + $0x220] sm:$0xff]
        %v1085 = vld [vmem:[%s328 + $0x228] sm:$0xff]
        %v1086 = vld [vmem:[%s328 + $0x230] sm:$0xff]
        %v1087 = vld [vmem:[%s328 + $0x238] sm:$0xff]
        %v1088 = vld [vmem:[%s328 + $0x240] sm:$0xff]
        %v1089 = vld [vmem:[%s328 + $0x248] sm:$0xff]
        %v1090 = vld [vmem:[%s328 + $0x250] sm:$0xff]
        %v1091 = vld [vmem:[%s328 + $0x258] sm:$0xff]
        %v1092 = vld [vmem:[%s328 + $0x260] sm:$0xff]
        %v1093 = vld [vmem:[%s328 + $0x268] sm:$0xff]
        %v1094 = vld [vmem:[%s328 + $0x270] sm:$0xff]
        %v1095 = vld [vmem:[%s328 + $0x278] sm:$0xff]
        %v1096 = vld [vmem:[%s328 + $0x280] sm:$0xff]
        %v1097 = vld [vmem:[%s328 + $0x288] sm:$0xff]
        %v1098 = vld [vmem:[%s328 + $0x290] sm:$0xff]
        %v1099 = vld [vmem:[%s328 + $0x298] sm:$0xff]
        %v1100 = vld [vmem:[%s328 + $0x2a0] sm:$0xff]
        %v1101 = vld [vmem:[%s328 + $0x2a8] sm:$0xff]
        %v1102 = vld [vmem:[%s328 + $0x2b0] sm:$0xff]
        %v1103 = vld [vmem:[%s328 + $0x2b8] sm:$0xff]
        %v1104 = vld [vmem:[%s328 + $0x2c0] sm:$0xff]
        %v1105 = vld [vmem:[%s328 + $0x2c8] sm:$0xff]
        %v1106 = vld [vmem:[%s328 + $0x2d0] sm:$0xff]
        %v1107 = vld [vmem:[%s328 + $0x2d8] sm:$0xff]
        %v1108 = vld [vmem:[%s328 + $0x2e0] sm:$0xff]
        %v1109 = vld [vmem:[%s328 + $0x2e8] sm:$0xff]
        %v1110 = vld [vmem:[%s328 + $0x2f0] sm:$0xff]
        %v1111 = vld [vmem:[%s328 + $0x2f8] sm:$0xff]
        %v1112 = vld [vmem:[%s328 + $0x300] sm:$0xff]
        %v1113 = vld [vmem:[%s328 + $0x308] sm:$0xff]
        %v1114 = vld [vmem:[%s328 + $0x310] sm:$0xff]
        %v1115 = vld [vmem:[%s328 + $0x318] sm:$0xff]
        %v1116 = vld [vmem:[%s328 + $0x320] sm:$0xff]
        %v1117 = vld [vmem:[%s328 + $0x328] sm:$0xff]
        %v1118 = vld [vmem:[%s328 + $0x330] sm:$0xff]
        %v1119 = vld [vmem:[%s328 + $0x338] sm:$0xff]
        %v1120 = vld [vmem:[%s328 + $0x340] sm:$0xff]
        %v1121 = vld [vmem:[%s328 + $0x348] sm:$0xff]
        %v1122 = vld [vmem:[%s328 + $0x350] sm:$0xff]
        %v1123 = vld [vmem:[%s328 + $0x358] sm:$0xff]
        %v1124 = vld [vmem:[%s328 + $0x360] sm:$0xff]
        %v1125 = vld [vmem:[%s328 + $0x368] sm:$0xff]
        %v1126 = vld [vmem:[%s328 + $0x370] sm:$0xff]
        %v1127 = vld [vmem:[%s328 + $0x378] sm:$0xff]
        %v1128 = vld [vmem:[%s328 + $0x380] sm:$0xff]
        %v1129 = vld [vmem:[%s328 + $0x388] sm:$0xff]
        %v1130 = vld [vmem:[%s328 + $0x390] sm:$0xff]
        %v1131 = vld [vmem:[%s328 + $0x398] sm:$0xff]
        %v1132 = vld [vmem:[%s328 + $0x3a0] sm:$0xff]
        %v1133 = vld [vmem:[%s328 + $0x3a8] sm:$0xff]
        %v1134 = vld [vmem:[%s328 + $0x3b0] sm:$0xff]
        %v1135 = vld [vmem:[%s328 + $0x3b8] sm:$0xff]
        %v1136 = vld [vmem:[%s328 + $0x3c0] sm:$0xff]
        %v1137 = vld [vmem:[%s328 + $0x3c8] sm:$0xff]
        %v1138 = vld [vmem:[%s328 + $0x3d0] sm:$0xff]
        %v1139 = vld [vmem:[%s328 + $0x3d8] sm:$0xff]
        %v1140 = vld [vmem:[%s328 + $0x3e0] sm:$0xff]
        %v1141 = vld [vmem:[%s328 + $0x3e8] sm:$0xff]
        %v1142 = vld [vmem:[%s328 + $0x3f0] sm:$0xff]
        %v1143 = vld [vmem:[%s328 + $0x3f8] sm:$0xff]
        %v1144 = vld [vmem:[%s328 + $0x400] sm:$0xff]
        %v1145 = vld [vmem:[%s328 + $0x408] sm:$0xff]
        %v1146 = vld [vmem:[%s328 + $0x410] sm:$0xff]
        %v1147 = vld [vmem:[%s328 + $0x418] sm:$0xff]
        %v1148 = vld [vmem:[%s328 + $0x420] sm:$0xff]
        %v1149 = vld [vmem:[%s328 + $0x428] sm:$0xff]
        %v1150 = vld [vmem:[%s328 + $0x430] sm:$0xff]
        %v1151 = vld [vmem:[%s328 + $0x438] sm:$0xff]
        %v1152 = vld [vmem:[%s328 + $0x440] sm:$0xff]
        %v1153 = vld [vmem:[%s328 + $0x448] sm:$0xff]
        %v1154 = vld [vmem:[%s328 + $0x450] sm:$0xff]
        %v1155 = vld [vmem:[%s328 + $0x458] sm:$0xff]
        %v1156 = vld [vmem:[%s328 + $0x460] sm:$0xff]
        %v1157 = vld [vmem:[%s328 + $0x468] sm:$0xff]
        %v1158 = vld [vmem:[%s328 + $0x470] sm:$0xff]
        %v1159 = vld [vmem:[%s328 + $0x478] sm:$0xff]
        %v1160 = vld [vmem:[%s328 + $0x480] sm:$0xff]
        %v1161 = vld [vmem:[%s328 + $0x488] sm:$0xff]
        %v1162 = vld [vmem:[%s328 + $0x490] sm:$0xff]
        %v1163 = vld [vmem:[%s328 + $0x498] sm:$0xff]
        %v1164 = vld [vmem:[%s328 + $0x4a0] sm:$0xff]
        %v1165 = vld [vmem:[%s328 + $0x4a8] sm:$0xff]
        %v1166 = vld [vmem:[%s328 + $0x4b0] sm:$0xff]
        %v1167 = vld [vmem:[%s328 + $0x4b8] sm:$0xff]
        %v1168 = vld [vmem:[%s328 + $0x4c0] sm:$0xff]
        %v1169 = vld [vmem:[%s328 + $0x4c8] sm:$0xff]
        %v1170 = vld [vmem:[%s328 + $0x4d0] sm:$0xff]
        %v1171 = vld [vmem:[%s328 + $0x4d8] sm:$0xff]
        %v1172 = vld [vmem:[%s328 + $0x4e0] sm:$0xff]
        %v1173 = vld [vmem:[%s328 + $0x4e8] sm:$0xff]
        %v1174 = vld [vmem:[%s328 + $0x4f0] sm:$0xff]
        %v1175 = vld [vmem:[%s328 + $0x4f8] sm:$0xff]
        %v1176 = vld [vmem:[%s328 + $0x500] sm:$0xff]
        %v1177 = vld [vmem:[%s328 + $0x508] sm:$0xff]
        %v1178 = vld [vmem:[%s328 + $0x510] sm:$0xff]
        %v1179 = vld [vmem:[%s328 + $0x518] sm:$0xff]
        %v1180 = vld [vmem:[%s328 + $0x520] sm:$0xff]
        %v1181 = vld [vmem:[%s328 + $0x528] sm:$0xff]
        %v1182 = vld [vmem:[%s328 + $0x530] sm:$0xff]
        %v1183 = vld [vmem:[%s328 + $0x538] sm:$0xff]
        %v1184 = vld [vmem:[%s328 + $0x540] sm:$0xff]
        %v1185 = vld [vmem:[%s328 + $0x548] sm:$0xff]
        %v1186 = vld [vmem:[%s328 + $0x550] sm:$0xff]
        %v1187 = vld [vmem:[%s328 + $0x558] sm:$0xff]
        %v1188 = vld [vmem:[%s328 + $0x560] sm:$0xff]
        %v1189 = vld [vmem:[%s328 + $0x568] sm:$0xff]
        %v1190 = vld [vmem:[%s328 + $0x570] sm:$0xff]
        %v1191 = vld [vmem:[%s328 + $0x578] sm:$0xff]
        %v1192 = vld [vmem:[%s328 + $0x580] sm:$0xff]
        %v1193 = vld [vmem:[%s328 + $0x588] sm:$0xff]
        %v1194 = vld [vmem:[%s328 + $0x590] sm:$0xff]
        %v1195 = vld [vmem:[%s328 + $0x598] sm:$0xff]
        %v1196 = vld [vmem:[%s328 + $0x5a0] sm:$0xff]
        %v1197 = vld [vmem:[%s328 + $0x5a8] sm:$0xff]
        %v1198 = vld [vmem:[%s328 + $0x5b0] sm:$0xff]
        %v1199 = vld [vmem:[%s328 + $0x5b8] sm:$0xff]
        %v1200 = vld [vmem:[%s328 + $0x5c0] sm:$0xff]
        %v1201 = vld [vmem:[%s328 + $0x5c8] sm:$0xff]
        %v1202 = vld [vmem:[%s328 + $0x5d0] sm:$0xff]
        %v1203 = vld [vmem:[%s328 + $0x5d8] sm:$0xff]
        %v1204 = vld [vmem:[%s328 + $0x5e0] sm:$0xff]
        %v1205 = vld [vmem:[%s328 + $0x5e8] sm:$0xff]
        %v1206 = vld [vmem:[%s328 + $0x5f0] sm:$0xff]
        %v1207 = vld [vmem:[%s328 + $0x5f8] sm:$0xff]
        %v1208 = vld [vmem:[%s328 + $0x600] sm:$0xff]
        %v1209 = vld [vmem:[%s328 + $0x608] sm:$0xff]
        %v1210 = vld [vmem:[%s328 + $0x610] sm:$0xff]
        %v1211 = vld [vmem:[%s328 + $0x618] sm:$0xff]
        %v1212 = vld [vmem:[%s328 + $0x620] sm:$0xff]
        %v1213 = vld [vmem:[%s328 + $0x628] sm:$0xff]
        %v1214 = vld [vmem:[%s328 + $0x630] sm:$0xff]
        %v1215 = vld [vmem:[%s328 + $0x638] sm:$0xff]
        %v1216 = vld [vmem:[%s328 + $0x640] sm:$0xff]
        %v1217 = vld [vmem:[%s328 + $0x648] sm:$0xff]
        %v1218 = vld [vmem:[%s328 + $0x650] sm:$0xff]
        %v1219 = vld [vmem:[%s328 + $0x658] sm:$0xff]
        %v1220 = vld [vmem:[%s328 + $0x660] sm:$0xff]
        %v1221 = vld [vmem:[%s328 + $0x668] sm:$0xff]
        %v1222 = vld [vmem:[%s328 + $0x670] sm:$0xff]
        %v1223 = vld [vmem:[%s328 + $0x678] sm:$0xff]
        %v1224 = vld [vmem:[%s328 + $0x680] sm:$0xff]
        %v1225 = vld [vmem:[%s328 + $0x688] sm:$0xff]
        %v1226 = vld [vmem:[%s328 + $0x690] sm:$0xff]
        %v1227 = vld [vmem:[%s328 + $0x698] sm:$0xff]
        %v1228 = vld [vmem:[%s328 + $0x6a0] sm:$0xff]
        %v1229 = vld [vmem:[%s328 + $0x6a8] sm:$0xff]
        %v1230 = vld [vmem:[%s328 + $0x6b0] sm:$0xff]
        %v1231 = vld [vmem:[%s328 + $0x6b8] sm:$0xff]
        %v1232 = vld [vmem:[%s328 + $0x6c0] sm:$0xff]
        %v1233 = vld [vmem:[%s328 + $0x6c8] sm:$0xff]
        %v1234 = vld [vmem:[%s328 + $0x6d0] sm:$0xff]
        %v1235 = vld [vmem:[%s328 + $0x6d8] sm:$0xff]
        %v1236 = vld [vmem:[%s328 + $0x6e0] sm:$0xff]
        %v1237 = vld [vmem:[%s328 + $0x6e8] sm:$0xff]
        %v1238 = vld [vmem:[%s328 + $0x6f0] sm:$0xff]
        %v1239 = vld [vmem:[%s328 + $0x6f8] sm:$0xff]
        %v1240 = vld [vmem:[%s328 + $0x700] sm:$0xff]
        %v1241 = vld [vmem:[%s328 + $0x708] sm:$0xff]
        %v1242 = vld [vmem:[%s328 + $0x710] sm:$0xff]
        %v1243 = vld [vmem:[%s328 + $0x718] sm:$0xff]
        %v1244 = vld [vmem:[%s328 + $0x720] sm:$0xff]
        %v1245 = vld [vmem:[%s328 + $0x728] sm:$0xff]
        %v1246 = vld [vmem:[%s328 + $0x730] sm:$0xff]
        %v1247 = vld [vmem:[%s328 + $0x738] sm:$0xff]
        %v1248 = vld [vmem:[%s328 + $0x740] sm:$0xff]
        %v1249 = vld [vmem:[%s328 + $0x748] sm:$0xff]
        %v1250 = vld [vmem:[%s328 + $0x750] sm:$0xff]
        %v1251 = vld [vmem:[%s328 + $0x758] sm:$0xff]
        %v1252 = vld [vmem:[%s328 + $0x760] sm:$0xff]
        %v1253 = vld [vmem:[%s328 + $0x768] sm:$0xff]
        %v1254 = vld [vmem:[%s328 + $0x770] sm:$0xff]
        %v1255 = vld [vmem:[%s328 + $0x778] sm:$0xff]
        %v1256 = vld [vmem:[%s328 + $0x780] sm:$0xff]
        %v1257 = vld [vmem:[%s328 + $0x788] sm:$0xff]
        %v1258 = vld [vmem:[%s328 + $0x790] sm:$0xff]
        %v1259 = vld [vmem:[%s328 + $0x798] sm:$0xff]
        %v1260 = vld [vmem:[%s328 + $0x7a0] sm:$0xff]
        %v1261 = vld [vmem:[%s328 + $0x7a8] sm:$0xff]
        %v1262 = vld [vmem:[%s328 + $0x7b0] sm:$0xff]
        %v1263 = vld [vmem:[%s328 + $0x7b8] sm:$0xff]
        %v1264 = vld [vmem:[%s328 + $0x7c0] sm:$0xff]
        %v1265 = vld [vmem:[%s328 + $0x7c8] sm:$0xff]
        %v1266 = vld [vmem:[%s328 + $0x7d0] sm:$0xff]
        %v1267 = vld [vmem:[%s328 + $0x7d8] sm:$0xff]
        %v1268 = vld [vmem:[%s328 + $0x7e0] sm:$0xff]
        %v1269 = vld [vmem:[%s328 + $0x7e8] sm:$0xff]
        %v1270 = vld [vmem:[%s328 + $0x7f0] sm:$0xff]
        %v1271 = vld [vmem:[%s328 + $0x7f8] sm:$0xff]
        %v1272 = vld [vmem:[%s328 + $0x800] sm:$0xff]
        %v1273 = vld [vmem:[%s328 + $0x808] sm:$0xff]
        %v1274 = vld [vmem:[%s328 + $0x810] sm:$0xff]
        %v1275 = vld [vmem:[%s328 + $0x818] sm:$0xff]
        %v1276 = vld [vmem:[%s328 + $0x820] sm:$0xff]
        %v1277 = vld [vmem:[%s328 + $0x828] sm:$0xff]
        %v1278 = vld [vmem:[%s328 + $0x830] sm:$0xff]
        %v1279 = vld [vmem:[%s328 + $0x838] sm:$0xff]
        %v1280 = vld [vmem:[%s328 + $0x840] sm:$0xff]
        %v1281 = vld [vmem:[%s328 + $0x848] sm:$0xff]
        %v1282 = vld [vmem:[%s328 + $0x850] sm:$0xff]
        %v1283 = vld [vmem:[%s328 + $0x858] sm:$0xff]
        %v1284 = vld [vmem:[%s328 + $0x860] sm:$0xff]
        %v1285 = vld [vmem:[%s328 + $0x868] sm:$0xff]
        %v1286 = vld [vmem:[%s328 + $0x870] sm:$0xff]
        %v1287 = vld [vmem:[%s328 + $0x878] sm:$0xff]
        %v1288 = vld [vmem:[%s328 + $0x880] sm:$0xff]
        %v1289 = vld [vmem:[%s328 + $0x888] sm:$0xff]
        %v1290 = vld [vmem:[%s328 + $0x890] sm:$0xff]
        %v1291 = vld [vmem:[%s328 + $0x898] sm:$0xff]
        %v1292 = vld [vmem:[%s328 + $0x8a0] sm:$0xff]
        %v1293 = vld [vmem:[%s328 + $0x8a8] sm:$0xff]
        %v1294 = vld [vmem:[%s328 + $0x8b0] sm:$0xff]
        %v1295 = vld [vmem:[%s328 + $0x8b8] sm:$0xff]
        %v1296 = vld [vmem:[%s328 + $0x8c0] sm:$0xff]
        %v1297 = vld [vmem:[%s328 + $0x8c8] sm:$0xff]
        %v1298 = vld [vmem:[%s328 + $0x8d0] sm:$0xff]
        %v1299 = vld [vmem:[%s328 + $0x8d8] sm:$0xff]
        %v1300 = vld [vmem:[%s328 + $0x8e0] sm:$0xff]
        %v1301 = vld [vmem:[%s328 + $0x8e8] sm:$0xff]
        %v1302 = vld [vmem:[%s328 + $0x8f0] sm:$0xff]
        %v1303 = vld [vmem:[%s328 + $0x8f8] sm:$0xff]
        %v1304 = vld [vmem:[%s328 + $0x900] sm:$0xff]
        %v1305 = vld [vmem:[%s328 + $0x908] sm:$0xff]
        %v1306 = vld [vmem:[%s328 + $0x910] sm:$0xff]
        %v1307 = vld [vmem:[%s328 + $0x918] sm:$0xff]
        %v1308 = vld [vmem:[%s328 + $0x920] sm:$0xff]
        %v1309 = vld [vmem:[%s328 + $0x928] sm:$0xff]
        %v1310 = vld [vmem:[%s328 + $0x930] sm:$0xff]
        %v1311 = vld [vmem:[%s328 + $0x938] sm:$0xff]
        %v1312 = vld [vmem:[%s328 + $0x940] sm:$0xff]
        %v1313 = vld [vmem:[%s328 + $0x948] sm:$0xff]
        %v1314 = vld [vmem:[%s328 + $0x950] sm:$0xff]
        %v1315 = vld [vmem:[%s328 + $0x958] sm:$0xff]
        %v1316 = vld [vmem:[%s328 + $0x960] sm:$0xff]
        %v1317 = vld [vmem:[%s328 + $0x968] sm:$0xff]
        %v1318 = vld [vmem:[%s328 + $0x970] sm:$0xff]
        %v1319 = vld [vmem:[%s328 + $0x978] sm:$0xff]
        %v1320 = vld [vmem:[%s328 + $0x980] sm:$0xff]
        %v1321 = vld [vmem:[%s328 + $0x988] sm:$0xff]
        %v1322 = vld [vmem:[%s328 + $0x990] sm:$0xff]
        %v1323 = vld [vmem:[%s328 + $0x998] sm:$0xff]
        %v1324 = vld [vmem:[%s328 + $0x9a0] sm:$0xff]
        %v1325 = vld [vmem:[%s328 + $0x9a8] sm:$0xff]
        %v1326 = vld [vmem:[%s328 + $0x9b0] sm:$0xff]
        %v1327 = vld [vmem:[%s328 + $0x9b8] sm:$0xff]
        %v1328 = vld [vmem:[%s328 + $0x9c0] sm:$0xff]
        %v1329 = vld [vmem:[%s328 + $0x9c8] sm:$0xff]
        %v1330 = vld [vmem:[%s328 + $0x9d0] sm:$0xff]
        %v1331 = vld [vmem:[%s328 + $0x9d8] sm:$0xff]
        %v1332 = vld [vmem:[%s328 + $0x9e0] sm:$0xff]
        %v1333 = vld [vmem:[%s328 + $0x9e8] sm:$0xff]
        %v1334 = vld [vmem:[%s328 + $0x9f0] sm:$0xff]
        %v1335 = vld [vmem:[%s328 + $0x9f8] sm:$0xff]
        %v1336 = vld [vmem:[%s328 + $0xa00] sm:$0xff]
        %v1337 = vld [vmem:[%s328 + $0xa08] sm:$0xff]
        %v1338 = vld [vmem:[%s328 + $0xa10] sm:$0xff]
        %v1339 = vld [vmem:[%s328 + $0xa18] sm:$0xff]
        %v1340 = vld [vmem:[%s328 + $0xa20] sm:$0xff]
        %v1341 = vld [vmem:[%s328 + $0xa28] sm:$0xff]
        %v1342 = vld [vmem:[%s328 + $0xa30] sm:$0xff]
        %v1343 = vld [vmem:[%s328 + $0xa38] sm:$0xff]
        %v1344 = vld [vmem:[%s328 + $0xa40] sm:$0xff]
        %v1345 = vld [vmem:[%s328 + $0xa48] sm:$0xff]
        %v1346 = vld [vmem:[%s328 + $0xa50] sm:$0xff]
        %v1347 = vld [vmem:[%s328 + $0xa58] sm:$0xff]
        %v1348 = vld [vmem:[%s328 + $0xa60] sm:$0xff]
        %v1349 = vld [vmem:[%s328 + $0xa68] sm:$0xff]
        %v1350 = vld [vmem:[%s328 + $0xa70] sm:$0xff]
        %v1351 = vld [vmem:[%s328 + $0xa78] sm:$0xff]
        %v1352 = vld [vmem:[%s328 + $0xa80] sm:$0xff]
        %v1353 = vld [vmem:[%s328 + $0xa88] sm:$0xff]
        %v1354 = vld [vmem:[%s328 + $0xa90] sm:$0xff]
        %v1355 = vld [vmem:[%s328 + $0xa98] sm:$0xff]
        %v1356 = vld [vmem:[%s328 + $0xaa0] sm:$0xff]
        %v1357 = vld [vmem:[%s328 + $0xaa8] sm:$0xff]
        %v1358 = vld [vmem:[%s328 + $0xab0] sm:$0xff]
        %v1359 = vld [vmem:[%s328 + $0xab8] sm:$0xff]
        %v1360 = vld [vmem:[%s328 + $0xac0] sm:$0xff]
        %v1361 = vld [vmem:[%s328 + $0xac8] sm:$0xff]
        %v1362 = vld [vmem:[%s328 + $0xad0] sm:$0xff]
        %v1363 = vld [vmem:[%s328 + $0xad8] sm:$0xff]
        %v1364 = vld [vmem:[%s328 + $0xae0] sm:$0xff]
        %v1365 = vld [vmem:[%s328 + $0xae8] sm:$0xff]
        %v1366 = vld [vmem:[%s328 + $0xaf0] sm:$0xff]
        %v1367 = vld [vmem:[%s328 + $0xaf8] sm:$0xff]
        %v1368 = vld [vmem:[%s328 + $0xb00] sm:$0xff]
        %v1369 = vld [vmem:[%s328 + $0xb08] sm:$0xff]
        %v1370 = vld [vmem:[%s328 + $0xb10] sm:$0xff]
        %v1371 = vld [vmem:[%s328 + $0xb18] sm:$0xff]
        %v1372 = vld [vmem:[%s328 + $0xb20] sm:$0xff]
        %v1373 = vld [vmem:[%s328 + $0xb28] sm:$0xff]
        %v1374 = vld [vmem:[%s328 + $0xb30] sm:$0xff]
        %v1375 = vld [vmem:[%s328 + $0xb38] sm:$0xff]
        %v1376 = vld [vmem:[%s328 + $0xb40] sm:$0xff]
        %v1377 = vld [vmem:[%s328 + $0xb48] sm:$0xff]
        %v1378 = vld [vmem:[%s328 + $0xb50] sm:$0xff]
        %v1379 = vld [vmem:[%s328 + $0xb58] sm:$0xff]
        %v1380 = vld [vmem:[%s328 + $0xb60] sm:$0xff]
        %v1381 = vld [vmem:[%s328 + $0xb68] sm:$0xff]
        %v1382 = vld [vmem:[%s328 + $0xb70] sm:$0xff]
        %v1383 = vld [vmem:[%s328 + $0xb78] sm:$0xff]
        %v1384 = vld [vmem:[%s328 + $0xb80] sm:$0xff]
        %v1385 = vld [vmem:[%s328 + $0xb88] sm:$0xff]
        %v1386 = vld [vmem:[%s328 + $0xb90] sm:$0xff]
        %v1387 = vld [vmem:[%s328 + $0xb98] sm:$0xff]
        %v1388 = vld [vmem:[%s328 + $0xba0] sm:$0xff]
        %v1389 = vld [vmem:[%s328 + $0xba8] sm:$0xff]
        %v1390 = vld [vmem:[%s328 + $0xbb0] sm:$0xff]
        %v1391 = vld [vmem:[%s328 + $0xbb8] sm:$0xff]
        %v1392 = vld [vmem:[%s328 + $0xbc0] sm:$0xff]
        %v1393 = vld [vmem:[%s328 + $0xbc8] sm:$0xff]
        %v1394 = vld [vmem:[%s328 + $0xbd0] sm:$0xff]
        %v1395 = vld [vmem:[%s328 + $0xbd8] sm:$0xff]
        %v1396 = vld [vmem:[%s328 + $0xbe0] sm:$0xff]
        %v1397 = vld [vmem:[%s328 + $0xbe8] sm:$0xff]
        %v1398 = vld [vmem:[%s328 + $0xbf0] sm:$0xff]
        %v1399 = vld [vmem:[%s328 + $0xbf8] sm:$0xff]
        %v1400 = vld [vmem:[%s328 + $0xc00] sm:$0xff]
        %v1401 = vld [vmem:[%s328 + $0xc08] sm:$0xff]
        %v1402 = vld [vmem:[%s328 + $0xc10] sm:$0xff]
        %v1403 = vld [vmem:[%s328 + $0xc18] sm:$0xff]
        %v1404 = vld [vmem:[%s328 + $0xc20] sm:$0xff]
        %v1405 = vld [vmem:[%s328 + $0xc28] sm:$0xff]
        %v1406 = vld [vmem:[%s328 + $0xc30] sm:$0xff]
        %v1407 = vld [vmem:[%s328 + $0xc38] sm:$0xff]
        %v1408 = vld [vmem:[%s328 + $0xc40] sm:$0xff]
        %v1409 = vld [vmem:[%s328 + $0xc48] sm:$0xff]
        %v1410 = vld [vmem:[%s328 + $0xc50] sm:$0xff]
        %v1411 = vld [vmem:[%s328 + $0xc58] sm:$0xff]
        %v1412 = vld [vmem:[%s328 + $0xc60] sm:$0xff]
        %v1413 = vld [vmem:[%s328 + $0xc68] sm:$0xff]
        %v1414 = vld [vmem:[%s328 + $0xc70] sm:$0xff]
        %v1415 = vld [vmem:[%s328 + $0xc78] sm:$0xff]
        %v1416 = vld [vmem:[%s328 + $0xc80] sm:$0xff]
        %v1417 = vld [vmem:[%s328 + $0xc88] sm:$0xff]
        %v1418 = vld [vmem:[%s328 + $0xc90] sm:$0xff]
        %v1419 = vld [vmem:[%s328 + $0xc98] sm:$0xff]
        %v1420 = vld [vmem:[%s328 + $0xca0] sm:$0xff]
        %v1421 = vld [vmem:[%s328 + $0xca8] sm:$0xff]
        %v1422 = vld [vmem:[%s328 + $0xcb0] sm:$0xff]
        %v1423 = vld [vmem:[%s328 + $0xcb8] sm:$0xff]
        %v1424 = vld [vmem:[%s328 + $0xcc0] sm:$0xff]
        %v1425 = vld [vmem:[%s328 + $0xcc8] sm:$0xff]
        %v1426 = vld [vmem:[%s328 + $0xcd0] sm:$0xff]
        %v1427 = vld [vmem:[%s328 + $0xcd8] sm:$0xff]
        %v1428 = vld [vmem:[%s328 + $0xce0] sm:$0xff]
        %v1429 = vld [vmem:[%s328 + $0xce8] sm:$0xff]
        %v1430 = vld [vmem:[%s328 + $0xcf0] sm:$0xff]
        %v1431 = vld [vmem:[%s328 + $0xcf8] sm:$0xff]
        %v1432 = vld [vmem:[%s328 + $0xd00] sm:$0xff]
        %v1433 = vld [vmem:[%s328 + $0xd08] sm:$0xff]
        %v1434 = vld [vmem:[%s328 + $0xd10] sm:$0xff]
        %v1435 = vld [vmem:[%s328 + $0xd18] sm:$0xff]
        %v1436 = vld [vmem:[%s328 + $0xd20] sm:$0xff]
        %v1437 = vld [vmem:[%s328 + $0xd28] sm:$0xff]
        %v1438 = vld [vmem:[%s328 + $0xd30] sm:$0xff]
        %v1439 = vld [vmem:[%s328 + $0xd38] sm:$0xff]
        %v1440 = vld [vmem:[%s328 + $0xd40] sm:$0xff]
        %v1441 = vld [vmem:[%s328 + $0xd48] sm:$0xff]
        %v1442 = vld [vmem:[%s328 + $0xd50] sm:$0xff]
        %v1443 = vld [vmem:[%s328 + $0xd58] sm:$0xff]
        %v1444 = vld [vmem:[%s328 + $0xd60] sm:$0xff]
        %v1445 = vld [vmem:[%s328 + $0xd68] sm:$0xff]
        %v1446 = vld [vmem:[%s328 + $0xd70] sm:$0xff]
        %v1447 = vld [vmem:[%s328 + $0xd78] sm:$0xff]
        %v1448 = vld [vmem:[%s328 + $0xd80] sm:$0xff]
        %v1449 = vld [vmem:[%s328 + $0xd88] sm:$0xff]
        %v1450 = vld [vmem:[%s328 + $0xd90] sm:$0xff]
        %v1451 = vld [vmem:[%s328 + $0xd98] sm:$0xff]
        %v1452 = vld [vmem:[%s328 + $0xda0] sm:$0xff]
        %v1453 = vld [vmem:[%s328 + $0xda8] sm:$0xff]
        %v1454 = vld [vmem:[%s328 + $0xdb0] sm:$0xff]
        %v1455 = vld [vmem:[%s328 + $0xdb8] sm:$0xff]
        %v1456 = vld [vmem:[%s328 + $0xdc0] sm:$0xff]
        %v1457 = vld [vmem:[%s328 + $0xdc8] sm:$0xff]
        %v1458 = vld [vmem:[%s328 + $0xdd0] sm:$0xff]
        %v1459 = vld [vmem:[%s328 + $0xdd8] sm:$0xff]
        %v1460 = vld [vmem:[%s328 + $0xde0] sm:$0xff]
        %v1461 = vld [vmem:[%s328 + $0xde8] sm:$0xff]
        %v1462 = vld [vmem:[%s328 + $0xdf0] sm:$0xff]
        %v1463 = vld [vmem:[%s328 + $0xdf8] sm:$0xff]
        %v1464 = vld [vmem:[%s328 + $0xe00] sm:$0xff]
        %v1465 = vld [vmem:[%s328 + $0xe08] sm:$0xff]
        %v1466 = vld [vmem:[%s328 + $0xe10] sm:$0xff]
        %v1467 = vld [vmem:[%s328 + $0xe18] sm:$0xff]
        %v1468 = vld [vmem:[%s328 + $0xe20] sm:$0xff]
        %v1469 = vld [vmem:[%s328 + $0xe28] sm:$0xff]
        %v1470 = vld [vmem:[%s328 + $0xe30] sm:$0xff]
        %v1471 = vld [vmem:[%s328 + $0xe38] sm:$0xff]
        %v1472 = vld [vmem:[%s328 + $0xe40] sm:$0xff]
        %v1473 = vld [vmem:[%s328 + $0xe48] sm:$0xff]
        %v1474 = vld [vmem:[%s328 + $0xe50] sm:$0xff]
        %v1475 = vld [vmem:[%s328 + $0xe58] sm:$0xff]
        %v1476 = vld [vmem:[%s328 + $0xe60] sm:$0xff]
        %v1477 = vld [vmem:[%s328 + $0xe68] sm:$0xff]
        %v1478 = vld [vmem:[%s328 + $0xe70] sm:$0xff]
        %v1479 = vld [vmem:[%s328 + $0xe78] sm:$0xff]
        %v1480 = vld [vmem:[%s328 + $0xe80] sm:$0xff]
        %v1481 = vld [vmem:[%s328 + $0xe88] sm:$0xff]
        %v1482 = vld [vmem:[%s328 + $0xe90] sm:$0xff]
        %v1483 = vld [vmem:[%s328 + $0xe98] sm:$0xff]
        %v1484 = vld [vmem:[%s328 + $0xea0] sm:$0xff]
        %v1485 = vld [vmem:[%s328 + $0xea8] sm:$0xff]
        %v1486 = vld [vmem:[%s328 + $0xeb0] sm:$0xff]
        %v1487 = vld [vmem:[%s328 + $0xeb8] sm:$0xff]
        %v1488 = vld [vmem:[%s328 + $0xec0] sm:$0xff]
        %v1489 = vld [vmem:[%s328 + $0xec8] sm:$0xff]
        %v1490 = vld [vmem:[%s328 + $0xed0] sm:$0xff]
        %v1491 = vld [vmem:[%s328 + $0xed8] sm:$0xff]
        %v1492 = vld [vmem:[%s328 + $0xee0] sm:$0xff]
        %v1493 = vld [vmem:[%s328 + $0xee8] sm:$0xff]
        %v1494 = vld [vmem:[%s328 + $0xef0] sm:$0xff]
        %v1495 = vld [vmem:[%s328 + $0xef8] sm:$0xff]
        %v1496 = vld [vmem:[%s328 + $0xf00] sm:$0xff]
        %v1497 = vld [vmem:[%s328 + $0xf08] sm:$0xff]
        %v1498 = vld [vmem:[%s328 + $0xf10] sm:$0xff]
        %v1499 = vld [vmem:[%s328 + $0xf18] sm:$0xff]
        %v1500 = vld [vmem:[%s328 + $0xf20] sm:$0xff]
        %v1501 = vld [vmem:[%s328 + $0xf28] sm:$0xff]
        %v1502 = vld [vmem:[%s328 + $0xf30] sm:$0xff]
        %v1503 = vld [vmem:[%s328 + $0xf38] sm:$0xff]
        %v1504 = vld [vmem:[%s328 + $0xf40] sm:$0xff]
        %v1505 = vld [vmem:[%s328 + $0xf48] sm:$0xff]
        %v1506 = vld [vmem:[%s328 + $0xf50] sm:$0xff]
        %v1507 = vld [vmem:[%s328 + $0xf58] sm:$0xff]
        %v1508 = vld [vmem:[%s328 + $0xf60] sm:$0xff]
        %v1509 = vld [vmem:[%s328 + $0xf68] sm:$0xff]
        %v1510 = vld [vmem:[%s328 + $0xf70] sm:$0xff]
        %v1511 = vld [vmem:[%s328 + $0xf78] sm:$0xff]
        %v1512 = vld [vmem:[%s328 + $0xf80] sm:$0xff]
        %v1513 = vld [vmem:[%s328 + $0xf88] sm:$0xff]
        %v1514 = vld [vmem:[%s328 + $0xf90] sm:$0xff]
        %v1515 = vld [vmem:[%s328 + $0xf98] sm:$0xff]
        %v1516 = vld [vmem:[%s328 + $0xfa0] sm:$0xff]
        %v1517 = vld [vmem:[%s328 + $0xfa8] sm:$0xff]
        %v1518 = vld [vmem:[%s328 + $0xfb0] sm:$0xff]
        %v1519 = vld [vmem:[%s328 + $0xfb8] sm:$0xff]
        %v1520 = vld [vmem:[%s328 + $0xfc0] sm:$0xff]
        %v1521 = vld [vmem:[%s328 + $0xfc8] sm:$0xff]
        %v1522 = vld [vmem:[%s328 + $0xfd0] sm:$0xff]
        %v1523 = vld [vmem:[%s328 + $0xfd8] sm:$0xff]
        %v1524 = vld [vmem:[%s328 + $0xfe0] sm:$0xff]
        %v1525 = vld [vmem:[%s328 + $0xfe8] sm:$0xff]
        %v1526 = vld [vmem:[%s328 + $0xff0] sm:$0xff]
        %v1527 = vld [vmem:[%s328 + $0xff8] sm:$0xff]
        %v1528 = vld [vmem:[%s328 + $0x1000] sm:$0xff]
        %v1529 = vld [vmem:[%s328 + $0x1008] sm:$0xff]
        %v1530 = vld [vmem:[%s328 + $0x1010] sm:$0xff]
        %v1531 = vld [vmem:[%s328 + $0x1018] sm:$0xff]
        %v1532 = vld [vmem:[%s328 + $0x1020] sm:$0xff]
        %v1533 = vld [vmem:[%s328 + $0x1028] sm:$0xff]
        %v1534 = vld [vmem:[%s328 + $0x1030] sm:$0xff]
        %v1535 = vld [vmem:[%s328 + $0x1038] sm:$0xff]
        %v1536 = vld [vmem:[%s328 + $0x1040] sm:$0xff]
        %v1537 = vld [vmem:[%s328 + $0x1048] sm:$0xff]
        %v1538 = vld [vmem:[%s328 + $0x1050] sm:$0xff]
        %v1539 = vld [vmem:[%s328 + $0x1058] sm:$0xff]
        %v1540 = vld [vmem:[%s328 + $0x1060] sm:$0xff]
        %v1541 = vld [vmem:[%s328 + $0x1068] sm:$0xff]
        %v1542 = vld [vmem:[%s328 + $0x1070] sm:$0xff]
        %v1543 = vld [vmem:[%s328 + $0x1078] sm:$0xff]
        %v1544 = vld [vmem:[%s328 + $0x1080] sm:$0xff]
        %v1545 = vld [vmem:[%s328 + $0x1088] sm:$0xff]
        %v1546 = vld [vmem:[%s328 + $0x1090] sm:$0xff]
        %v1547 = vld [vmem:[%s328 + $0x1098] sm:$0xff]
        %v1548 = vld [vmem:[%s328 + $0x10a0] sm:$0xff]
        %v1549 = vld [vmem:[%s328 + $0x10a8] sm:$0xff]
        %v1550 = vld [vmem:[%s328 + $0x10b0] sm:$0xff]
        %v1551 = vld [vmem:[%s328 + $0x10b8] sm:$0xff]
        %v1552 = vld [vmem:[%s328 + $0x10c0] sm:$0xff]
        %v1553 = vld [vmem:[%s328 + $0x10c8] sm:$0xff]
        %v1554 = vld [vmem:[%s328 + $0x10d0] sm:$0xff]
        %v1555 = vld [vmem:[%s328 + $0x10d8] sm:$0xff]
        %v1556 = vld [vmem:[%s328 + $0x10e0] sm:$0xff]
        %v1557 = vld [vmem:[%s328 + $0x10e8] sm:$0xff]
        %v1558 = vld [vmem:[%s328 + $0x10f0] sm:$0xff]
        %v1559 = vld [vmem:[%s328 + $0x10f8] sm:$0xff]
        %v1560 = vld [vmem:[%s328 + $0x1100] sm:$0xff]
        %v1561 = vld [vmem:[%s328 + $0x1108] sm:$0xff]
        %v1562 = vld [vmem:[%s328 + $0x1110] sm:$0xff]
        %v1563 = vld [vmem:[%s328 + $0x1118] sm:$0xff]
        %v1564 = vld [vmem:[%s328 + $0x1120] sm:$0xff]
        %v1565 = vld [vmem:[%s328 + $0x1128] sm:$0xff]
        %v1566 = vld [vmem:[%s328 + $0x1130] sm:$0xff]
        %v1567 = vld [vmem:[%s328 + $0x1138] sm:$0xff]
        %v1568 = vld [vmem:[%s328 + $0x1140] sm:$0xff]
        %v1569 = vld [vmem:[%s328 + $0x1148] sm:$0xff]
        %v1570 = vld [vmem:[%s328 + $0x1150] sm:$0xff]
        %v1571 = vld [vmem:[%s328 + $0x1158] sm:$0xff]
        %v1572 = vld [vmem:[%s328 + $0x1160] sm:$0xff]
        %v1573 = vld [vmem:[%s328 + $0x1168] sm:$0xff]
        %v1574 = vld [vmem:[%s328 + $0x1170] sm:$0xff]
        %v1575 = vld [vmem:[%s328 + $0x1178] sm:$0xff]
        %v1576 = vld [vmem:[%s328 + $0x1180] sm:$0xff]
        %v1577 = vld [vmem:[%s328 + $0x1188] sm:$0xff]
        %v1578 = vld [vmem:[%s328 + $0x1190] sm:$0xff]
        %v1579 = vld [vmem:[%s328 + $0x1198] sm:$0xff]
        %v1580 = vld [vmem:[%s328 + $0x11a0] sm:$0xff]
        %v1581 = vld [vmem:[%s328 + $0x11a8] sm:$0xff]
        %v1582 = vld [vmem:[%s328 + $0x11b0] sm:$0xff]
        %v1583 = vld [vmem:[%s328 + $0x11b8] sm:$0xff]
        %v1584 = vld [vmem:[%s328 + $0x11c0] sm:$0xff]
        %v1585 = vld [vmem:[%s328 + $0x11c8] sm:$0xff]
        %v1586 = vld [vmem:[%s328 + $0x11d0] sm:$0xff]
        %v1587 = vld [vmem:[%s328 + $0x11d8] sm:$0xff]
        %v1588 = vld [vmem:[%s328 + $0x11e0] sm:$0xff]
        %v1589 = vld [vmem:[%s328 + $0x11e8] sm:$0xff]
        %v1590 = vld [vmem:[%s328 + $0x11f0] sm:$0xff]
        %v1591 = vld [vmem:[%s328 + $0x11f8] sm:$0xff]
        %v1592 = vld [vmem:[%s328 + $0x1200] sm:$0xff]
        %v1593 = vld [vmem:[%s328 + $0x1208] sm:$0xff]
        %v1594 = vld [vmem:[%s328 + $0x1210] sm:$0xff]
        %v1595 = vld [vmem:[%s328 + $0x1218] sm:$0xff]
        %v1596 = vld [vmem:[%s328 + $0x1220] sm:$0xff]
        %v1597 = vld [vmem:[%s328 + $0x1228] sm:$0xff]
        %v1598 = vld [vmem:[%s328 + $0x1230] sm:$0xff]
        %v1599 = vld [vmem:[%s328 + $0x1238] sm:$0xff]
        %v1600 = vld [vmem:[%s328 + $0x1240] sm:$0xff]
        %v1601 = vld [vmem:[%s328 + $0x1248] sm:$0xff]
        %v1602 = vld [vmem:[%s328 + $0x1250] sm:$0xff]
        %v1603 = vld [vmem:[%s328 + $0x1258] sm:$0xff]
        %v1604 = vld [vmem:[%s328 + $0x1260] sm:$0xff]
        %v1605 = vld [vmem:[%s328 + $0x1268] sm:$0xff]
        %v1606 = vld [vmem:[%s328 + $0x1270] sm:$0xff]
        %v1607 = vld [vmem:[%s328 + $0x1278] sm:$0xff]
        %v1608 = vld [vmem:[%s328 + $0x1280] sm:$0xff]
        %v1609 = vld [vmem:[%s328 + $0x1288] sm:$0xff]
        %v1610 = vld [vmem:[%s328 + $0x1290] sm:$0xff]
        %v1611 = vld [vmem:[%s328 + $0x1298] sm:$0xff]
        %v1612 = vld [vmem:[%s328 + $0x12a0] sm:$0xff]
        %v1613 = vld [vmem:[%s328 + $0x12a8] sm:$0xff]
        %v1614 = vld [vmem:[%s328 + $0x12b0] sm:$0xff]
        %v1615 = vld [vmem:[%s328 + $0x12b8] sm:$0xff]
        %v1616 = vld [vmem:[%s328 + $0x12c0] sm:$0xff]
        %v1617 = vld [vmem:[%s328 + $0x12c8] sm:$0xff]
        %v1618 = vld [vmem:[%s328 + $0x12d0] sm:$0xff]
        %v1619 = vld [vmem:[%s328 + $0x12d8] sm:$0xff]
        %v1620 = vld [vmem:[%s328 + $0x12e0] sm:$0xff]
        %v1621 = vld [vmem:[%s328 + $0x12e8] sm:$0xff]
        %v1622 = vld [vmem:[%s328 + $0x12f0] sm:$0xff]
        %v1623 = vld [vmem:[%s328 + $0x12f8] sm:$0xff]
        %v1624 = vld [vmem:[%s328 + $0x1300] sm:$0xff]
        %v1625 = vld [vmem:[%s328 + $0x1308] sm:$0xff]
        %v1626 = vld [vmem:[%s328 + $0x1310] sm:$0xff]
        %v1627 = vld [vmem:[%s328 + $0x1318] sm:$0xff]
        %v1628 = vld [vmem:[%s328 + $0x1320] sm:$0xff]
        %v1629 = vld [vmem:[%s328 + $0x1328] sm:$0xff]
        %v1630 = vld [vmem:[%s328 + $0x1330] sm:$0xff]
        %v1631 = vld [vmem:[%s328 + $0x1338] sm:$0xff]
        %v1632 = vld [vmem:[%s328 + $0x1340] sm:$0xff]
        %v1633 = vld [vmem:[%s328 + $0x1348] sm:$0xff]
        %v1634 = vld [vmem:[%s328 + $0x1350] sm:$0xff]
        %v1635 = vld [vmem:[%s328 + $0x1358] sm:$0xff]
        %v1636 = vld [vmem:[%s328 + $0x1360] sm:$0xff]
        %v1637 = vld [vmem:[%s328 + $0x1368] sm:$0xff]
        %v1638 = vld [vmem:[%s328 + $0x1370] sm:$0xff]
        %v1639 = vld [vmem:[%s328 + $0x1378] sm:$0xff]
        %v1640 = vld [vmem:[%s328 + $0x1380] sm:$0xff]
        %v1642 = vsel %vm802, %v1015, 0
        %1644 = vmatprep.subr.mxu0 %v1017
        %1645 = vmatpush1.msra.mxu0 %v1016
        %1646 = vmatprep.subr.mxu0 %v1022
        %1647 = vmatpush1.msra.mxu0 %v1021
        %1648 = vmatprep.subr.mxu0 %v1027
        %1649 = vmatpush1.msra.mxu0 %v1026
        %1650 = vmatprep.subr.mxu0 %v1032
        %1651 = vmatpush1.msra.mxu0 %v1031
        %1652 = vmatprep.subr.mxu0 %v1037
        %1653 = vmatpush1.msra.mxu0 %v1036
        %1654 = vmatprep.subr.mxu0 %v1042
        %1655 = vmatpush1.msra.mxu0 %v1041
        %1656 = vmatprep.subr.mxu0 %v1047
        %1657 = vmatpush1.msra.mxu0 %v1046
        %1658 = vmatprep.subr.mxu0 %v1052
        %1659 = vmatpush1.msra.mxu0 %v1051
        %1660 = vmatprep.subr.mxu0 %v1057
        %1661 = vmatpush1.msra.mxu0 %v1056
        %1662 = vmatprep.subr.mxu0 %v1062
        %1663 = vmatpush1.msra.mxu0 %v1061
        %1664 = vmatprep.subr.mxu0 %v1067
        %1665 = vmatpush1.msra.mxu0 %v1066
        %1666 = vmatprep.subr.mxu0 %v1072
        %1667 = vmatpush1.msra.mxu0 %v1071
        %1668 = vmatprep.subr.mxu0 %v1077
        %1669 = vmatpush1.msra.mxu0 %v1076
        %1670 = vmatprep.subr.mxu0 %v1082
        %1671 = vmatpush1.msra.mxu0 %v1081
        %1672 = vmatprep.subr.mxu0 %v1087
        %1673 = vmatpush1.msra.mxu0 %v1086
        %1674 = vmatprep.subr.mxu0 %v1092
        %1675 = vmatpush1.msra.mxu0 %v1091
        %1676 = vmatprep.subr.mxu0 %v1097
        %1677 = vmatpush1.msra.mxu0 %v1096
        %1678 = vmatprep.subr.mxu0 %v1102
        %1679 = vmatpush1.msra.mxu0 %v1101
        %1680 = vmatprep.subr.mxu0 %v1107
        %1681 = vmatpush1.msra.mxu0 %v1106
        %1682 = vmatprep.subr.mxu0 %v1112
        %1683 = vmatpush1.msra.mxu0 %v1111
        %1684 = vmatprep.subr.mxu0 %v1117
        %1685 = vmatpush1.msra.mxu0 %v1116
        %1686 = vmatprep.subr.mxu0 %v1122
        %1687 = vmatpush1.msra.mxu0 %v1121
        %1688 = vmatprep.subr.mxu0 %v1127
        %1689 = vmatpush1.msra.mxu0 %v1126
        %1690 = vmatprep.subr.mxu0 %v1132
        %1691 = vmatpush1.msra.mxu0 %v1131
        %1692 = vmatprep.subr.mxu0 %v1137
        %1693 = vmatpush1.msra.mxu0 %v1136
        %1694 = vmatprep.subr.mxu0 %v1142
        %1695 = vmatpush1.msra.mxu0 %v1141
        %1696 = vmatprep.subr.mxu0 %v1147
        %1697 = vmatpush1.msra.mxu0 %v1146
        %1698 = vmatprep.subr.mxu0 %v1152
        %1699 = vmatpush1.msra.mxu0 %v1151
        %1700 = vmatprep.subr.mxu0 %v1157
        %1701 = vmatpush1.msra.mxu0 %v1156
        %1702 = vmatprep.subr.mxu0 %v1162
        %1703 = vmatpush1.msra.mxu0 %v1161
        %1704 = vmatprep.subr.mxu0 %v1167
        %1705 = vmatpush1.msra.mxu0 %v1166
        %1706 = vmatprep.subr.mxu0 %v1172
        %1707 = vmatpush1.msra.mxu0 %v1171
        %1708 = vmatprep.mubr.f32.mxu0 %v1009
        %1709 = vmatmul.mubr.f32.gmra.mrb[0].mxu0 %v1008
        %v1710 = vpop.f32.mrb[0].mxu0
        %v1711 = vadd.f32 0.0, %v1710
        %v1712 = vpop.f32.mrb[0].mxu0
        %v1713 = vadd.f32 0.0, %v1712
        %1714 = vdwg.mxu0
        %1715 = vmatprep.subr.mxu0 %v1177
        %1716 = vmatpush1.msra.mxu0 %v1176
        %1717 = vmatprep.subr.mxu0 %v1182
        %1718 = vmatpush1.msra.mxu0 %v1181
        %1719 = vmatprep.subr.mxu0 %v1187
        %1720 = vmatpush1.msra.mxu0 %v1186
        %1721 = vmatprep.subr.mxu0 %v1192
        %1722 = vmatpush1.msra.mxu0 %v1191
        %1723 = vmatprep.subr.mxu0 %v1197
        %1724 = vmatpush1.msra.mxu0 %v1196
        %1725 = vmatprep.subr.mxu0 %v1202
        %1726 = vmatpush1.msra.mxu0 %v1201
        %1727 = vmatprep.subr.mxu0 %v1207
        %1728 = vmatpush1.msra.mxu0 %v1206
        %1729 = vmatprep.subr.mxu0 %v1212
        %1730 = vmatpush1.msra.mxu0 %v1211
        %1731 = vmatprep.subr.mxu0 %v1217
        %1732 = vmatpush1.msra.mxu0 %v1216
        %1733 = vmatprep.subr.mxu0 %v1222
        %1734 = vmatpush1.msra.mxu0 %v1221
        %1735 = vmatprep.subr.mxu0 %v1227
        %1736 = vmatpush1.msra.mxu0 %v1226
        %1737 = vmatprep.subr.mxu0 %v1232
        %1738 = vmatpush1.msra.mxu0 %v1231
        %1739 = vmatprep.subr.mxu0 %v1237
        %1740 = vmatpush1.msra.mxu0 %v1236
        %1741 = vmatprep.subr.mxu0 %v1242
        %1742 = vmatpush1.msra.mxu0 %v1241
        %1743 = vmatprep.subr.mxu0 %v1247
        %1744 = vmatpush1.msra.mxu0 %v1246
        %1745 = vmatprep.subr.mxu0 %v1252
        %1746 = vmatpush1.msra.mxu0 %v1251
        %1747 = vmatprep.subr.mxu0 %v1257
        %1748 = vmatpush1.msra.mxu0 %v1256
        %1749 = vmatprep.subr.mxu0 %v1262
        %1750 = vmatpush1.msra.mxu0 %v1261
        %1751 = vmatprep.subr.mxu0 %v1267
        %1752 = vmatpush1.msra.mxu0 %v1266
        %1753 = vmatprep.subr.mxu0 %v1272
        %1754 = vmatpush1.msra.mxu0 %v1271
        %1755 = vmatprep.subr.mxu0 %v1277
        %1756 = vmatpush1.msra.mxu0 %v1276
        %1757 = vmatprep.subr.mxu0 %v1282
        %1758 = vmatpush1.msra.mxu0 %v1281
        %1759 = vmatprep.subr.mxu0 %v1287
        %1760 = vmatpush1.msra.mxu0 %v1286
        %1761 = vmatprep.subr.mxu0 %v1292
        %1762 = vmatpush1.msra.mxu0 %v1291
        %1763 = vmatprep.subr.mxu0 %v1297
        %1764 = vmatpush1.msra.mxu0 %v1296
        %1765 = vmatprep.subr.mxu0 %v1302
        %1766 = vmatpush1.msra.mxu0 %v1301
        %1767 = vmatprep.subr.mxu0 %v1307
        %1768 = vmatpush1.msra.mxu0 %v1306
        %1769 = vmatprep.subr.mxu0 %v1312
        %1770 = vmatpush1.msra.mxu0 %v1311
        %1771 = vmatprep.subr.mxu0 %v1317
        %1772 = vmatpush1.msra.mxu0 %v1316
        %1773 = vmatprep.subr.mxu0 %v1322
        %1774 = vmatpush1.msra.mxu0 %v1321
        %1775 = vmatprep.subr.mxu0 %v1327
        %1776 = vmatpush1.msra.mxu0 %v1326
        %1777 = vmatprep.subr.mxu0 %v1332
        %1778 = vmatpush1.msra.mxu0 %v1331
        %1779 = vmatprep.mubr.f32.mxu0 %v1011
        %1780 = vmatmul.mubr.f32.gmra.mrb[0].mxu0 %v1010
        %v1781 = vpop.f32.mrb[0].mxu0
        %v1782 = vadd.f32 %v1711, %v1781
        %v1783 = vpop.f32.mrb[0].mxu0
        %v1784 = vadd.f32 %v1713, %v1783
        %1785 = vdwg.mxu0
        %1786 = vmatprep.subr.mxu0 %v1337
        %1787 = vmatpush1.msra.mxu0 %v1336
        %1788 = vmatprep.subr.mxu0 %v1342
        %1789 = vmatpush1.msra.mxu0 %v1341
        %1790 = vmatprep.subr.mxu0 %v1347
        %1791 = vmatpush1.msra.mxu0 %v1346
        %1792 = vmatprep.subr.mxu0 %v1352
        %1793 = vmatpush1.msra.mxu0 %v1351
        %1794 = vmatprep.subr.mxu0 %v1357
        %1795 = vmatpush1.msra.mxu0 %v1356
        %1796 = vmatprep.subr.mxu0 %v1362
        %1797 = vmatpush1.msra.mxu0 %v1361
        %1798 = vmatprep.subr.mxu0 %v1367
        %1799 = vmatpush1.msra.mxu0 %v1366
        %1800 = vmatprep.subr.mxu0 %v1372
        %1801 = vmatpush1.msra.mxu0 %v1371
        %1802 = vmatprep.subr.mxu0 %v1377
        %1803 = vmatpush1.msra.mxu0 %v1376
        %1804 = vmatprep.subr.mxu0 %v1382
        %1805 = vmatpush1.msra.mxu0 %v1381
        %1806 = vmatprep.subr.mxu0 %v1387
        %1807 = vmatpush1.msra.mxu0 %v1386
        %1808 = vmatprep.subr.mxu0 %v1392
        %1809 = vmatpush1.msra.mxu0 %v1391
        %1810 = vmatprep.subr.mxu0 %v1397
        %1811 = vmatpush1.msra.mxu0 %v1396
        %1812 = vmatprep.subr.mxu0 %v1402
        %1813 = vmatpush1.msra.mxu0 %v1401
        %1814 = vmatprep.subr.mxu0 %v1407
        %1815 = vmatpush1.msra.mxu0 %v1406
        %1816 = vmatprep.subr.mxu0 %v1412
        %1817 = vmatpush1.msra.mxu0 %v1411
        %1818 = vmatprep.subr.mxu0 %v1417
        %1819 = vmatpush1.msra.mxu0 %v1416
        %1820 = vmatprep.subr.mxu0 %v1422
        %1821 = vmatpush1.msra.mxu0 %v1421
        %1822 = vmatprep.subr.mxu0 %v1427
        %1823 = vmatpush1.msra.mxu0 %v1426
        %1824 = vmatprep.subr.mxu0 %v1432
        %1825 = vmatpush1.msra.mxu0 %v1431
        %1826 = vmatprep.subr.mxu0 %v1437
        %1827 = vmatpush1.msra.mxu0 %v1436
        %1828 = vmatprep.subr.mxu0 %v1442
        %1829 = vmatpush1.msra.mxu0 %v1441
        %1830 = vmatprep.subr.mxu0 %v1447
        %1831 = vmatpush1.msra.mxu0 %v1446
        %1832 = vmatprep.subr.mxu0 %v1452
        %1833 = vmatpush1.msra.mxu0 %v1451
        %1834 = vmatprep.subr.mxu0 %v1457
        %1835 = vmatpush1.msra.mxu0 %v1456
        %1836 = vmatprep.subr.mxu0 %v1462
        %1837 = vmatpush1.msra.mxu0 %v1461
        %1838 = vmatprep.subr.mxu0 %v1467
        %1839 = vmatpush1.msra.mxu0 %v1466
        %1840 = vmatprep.subr.mxu0 %v1472
        %1841 = vmatpush1.msra.mxu0 %v1471
        %1842 = vmatprep.subr.mxu0 %v1477
        %1843 = vmatpush1.msra.mxu0 %v1476
        %1844 = vmatprep.subr.mxu0 %v1482
        %1845 = vmatpush1.msra.mxu0 %v1481
        %1846 = vmatprep.subr.mxu0 %v1487
        %1847 = vmatpush1.msra.mxu0 %v1486
        %1848 = vmatprep.subr.mxu0 %v1492
        %1849 = vmatpush1.msra.mxu0 %v1491
        %1850 = vmatprep.mubr.f32.mxu0 %v1013
        %1851 = vmatmul.mubr.f32.gmra.mrb[0].mxu0 %v1012
        %v1852 = vpop.f32.mrb[0].mxu0
        %v1853 = vadd.f32 %v1782, %v1852
        %v1854 = vpop.f32.mrb[0].mxu0
        %v1855 = vadd.f32 %v1784, %v1854
        %1856 = vdwg.mxu0
        %1857 = vmatprep.subr.mxu0 %v1497
        %1858 = vmatpush1.msra.mxu0 %v1496
        %1859 = vmatprep.subr.mxu0 %v1502
        %1860 = vmatpush1.msra.mxu0 %v1501
        %1861 = vmatprep.subr.mxu0 %v1507
        %1862 = vmatpush1.msra.mxu0 %v1506
        %1863 = vmatprep.subr.mxu0 %v1512
        %1864 = vmatpush1.msra.mxu0 %v1511
        %1865 = vmatprep.subr.mxu0 %v1517
        %1866 = vmatpush1.msra.mxu0 %v1516
        %1867 = vmatprep.subr.mxu0 %v1522
        %1868 = vmatpush1.msra.mxu0 %v1521
        %1869 = vmatprep.subr.mxu0 %v1527
        %1870 = vmatpush1.msra.mxu0 %v1526
        %1871 = vmatprep.subr.mxu0 %v1532
        %1872 = vmatpush1.msra.mxu0 %v1531
        %1873 = vmatprep.subr.mxu0 %v1537
        %1874 = vmatpush1.msra.mxu0 %v1536
        %1875 = vmatprep.subr.mxu0 %v1542
        %1876 = vmatpush1.msra.mxu0 %v1541
        %1877 = vmatprep.subr.mxu0 %v1547
        %1878 = vmatpush1.msra.mxu0 %v1546
        %1879 = vmatprep.subr.mxu0 %v1552
        %1880 = vmatpush1.msra.mxu0 %v1551
        %1881 = vmatprep.subr.mxu0 %v1557
        %1882 = vmatpush1.msra.mxu0 %v1556
        %1883 = vmatprep.subr.mxu0 %v1562
        %1884 = vmatpush1.msra.mxu0 %v1561
        %1885 = vmatprep.subr.mxu0 %v1567
        %1886 = vmatpush1.msra.mxu0 %v1566
        %1887 = vmatprep.subr.mxu0 %v1572
        %1888 = vmatpush1.msra.mxu0 %v1571
        %1889 = vmatprep.subr.mxu0 %v1577
        %1890 = vmatpush1.msra.mxu0 %v1576
        %1891 = vmatprep.subr.mxu0 %v1582
        %1892 = vmatpush1.msra.mxu0 %v1581
        %1893 = vmatprep.subr.mxu0 %v1587
        %1894 = vmatpush1.msra.mxu0 %v1586
        %1895 = vmatprep.subr.mxu0 %v1592
        %1896 = vmatpush1.msra.mxu0 %v1591
        %1897 = vmatprep.subr.mxu0 %v1597
        %1898 = vmatpush1.msra.mxu0 %v1596
        %1899 = vmatprep.subr.mxu0 %v1602
        %1900 = vmatpush1.msra.mxu0 %v1601
        %1901 = vmatprep.subr.mxu0 %v1607
        %1902 = vmatpush1.msra.mxu0 %v1606
        %1903 = vmatprep.subr.mxu0 %v1612
        %1904 = vmatpush1.msra.mxu0 %v1611
        %1905 = vmatprep.subr.mxu0 %v1617
        %1906 = vmatpush1.msra.mxu0 %v1616
        %1907 = vmatprep.subr.mxu0 %v1622
        %1908 = vmatpush1.msra.mxu0 %v1621
        %1909 = vmatprep.subr.mxu0 %v1627
        %1910 = vmatpush1.msra.mxu0 %v1626
        %1911 = vmatprep.subr.mxu0 %v1632
        %1912 = vmatpush1.msra.mxu0 %v1631
        %1913 = vmatprep.subr.mxu0 %v1637
        %1914 = vmatpush1.msra.mxu0 %v1636
        %1915 = vmatprep.subr.mxu0 0.0
        %1916 = vmatpush1.msra.mxu0 0.0
        %1917 = vmatprep.subr.mxu0 0.0
        %1918 = vmatpush1.msra.mxu0 0.0
        %1919 = vmatprep.subr.mxu0 0.0
        %1920 = vmatpush1.msra.mxu0 0.0
        %1921 = vmatprep.mubr.f32.mxu0 %v1642
        %1922 = vmatmul.mubr.f32.gmra.mrb[0].mxu0 %v1014
        %v1923 = vpop.f32.mrb[0].mxu0
        %v1924 = vadd.f32 %v1853, %v1923
        %v1925 = vpop.f32.mrb[0].mxu0
        %v1926 = vadd.f32 %v1855, %v1925
        %1927 = vdwg.mxu0
        %1928 = vmatprep.subr.mxu0 %v1019
        %1929 = vmatpush1.msra.mxu0 %v1018
        %1930 = vmatprep.subr.mxu0 %v1024
        %1931 = vmatpush1.msra.mxu0 %v1023
        %1932 = vmatprep.subr.mxu0 %v1029
        %1933 = vmatpush1.msra.mxu0 %v1028
        %1934 = vmatprep.subr.mxu0 %v1034
        %1935 = vmatpush1.msra.mxu0 %v1033
        %1936 = vmatprep.subr.mxu0 %v1039
        %1937 = vmatpush1.msra.mxu0 %v1038
        %1938 = vmatprep.subr.mxu0 %v1044
        %1939 = vmatpush1.msra.mxu0 %v1043
        %1940 = vmatprep.subr.mxu0 %v1049
        %1941 = vmatpush1.msra.mxu0 %v1048
        %1942 = vmatprep.subr.mxu0 %v1054
        %1943 = vmatpush1.msra.mxu0 %v1053
        %1944 = vmatprep.subr.mxu0 %v1059
        %1945 = vmatpush1.msra.mxu0 %v1058
        %1946 = vmatprep.subr.mxu0 %v1064
        %1947 = vmatpush1.msra.mxu0 %v1063
        %1948 = vmatprep.subr.mxu0 %v1069
        %1949 = vmatpush1.msra.mxu0 %v1068
        %1950 = vmatprep.subr.mxu0 %v1074
        %1951 = vmatpush1.msra.mxu0 %v1073
        %1952 = vmatprep.subr.mxu0 %v1079
        %1953 = vmatpush1.msra.mxu0 %v1078
        %1954 = vmatprep.subr.mxu0 %v1084
        %1955 = vmatpush1.msra.mxu0 %v1083
        %1956 = vmatprep.subr.mxu0 %v1089
        %1957 = vmatpush1.msra.mxu0 %v1088
        %1958 = vmatprep.subr.mxu0 %v1094
        %1959 = vmatpush1.msra.mxu0 %v1093
        %1960 = vmatprep.subr.mxu0 %v1099
        %1961 = vmatpush1.msra.mxu0 %v1098
        %1962 = vmatprep.subr.mxu0 %v1104
        %1963 = vmatpush1.msra.mxu0 %v1103
        %1964 = vmatprep.subr.mxu0 %v1109
        %1965 = vmatpush1.msra.mxu0 %v1108
        %1966 = vmatprep.subr.mxu0 %v1114
        %1967 = vmatpush1.msra.mxu0 %v1113
        %1968 = vmatprep.subr.mxu0 %v1119
        %1969 = vmatpush1.msra.mxu0 %v1118
        %1970 = vmatprep.subr.mxu0 %v1124
        %1971 = vmatpush1.msra.mxu0 %v1123
        %1972 = vmatprep.subr.mxu0 %v1129
        %1973 = vmatpush1.msra.mxu0 %v1128
        %1974 = vmatprep.subr.mxu0 %v1134
        %1975 = vmatpush1.msra.mxu0 %v1133
        %1976 = vmatprep.subr.mxu0 %v1139
        %1977 = vmatpush1.msra.mxu0 %v1138
        %1978 = vmatprep.subr.mxu0 %v1144
        %1979 = vmatpush1.msra.mxu0 %v1143
        %1980 = vmatprep.subr.mxu0 %v1149
        %1981 = vmatpush1.msra.mxu0 %v1148
        %1982 = vmatprep.subr.mxu0 %v1154
        %1983 = vmatpush1.msra.mxu0 %v1153
        %1984 = vmatprep.subr.mxu0 %v1159
        %1985 = vmatpush1.msra.mxu0 %v1158
        %1986 = vmatprep.subr.mxu0 %v1164
        %1987 = vmatpush1.msra.mxu0 %v1163
        %1988 = vmatprep.subr.mxu0 %v1169
        %1989 = vmatpush1.msra.mxu0 %v1168
        %1990 = vmatprep.subr.mxu0 %v1174
        %1991 = vmatpush1.msra.mxu0 %v1173
        %1992 = vmatprep.mubr.f32.mxu0 %v1009
        %1993 = vmatmul.mubr.f32.gmra.mrb[0].mxu0 %v1008
        %v1994 = vpop.f32.mrb[0].mxu0
        %v1995 = vadd.f32 0.0, %v1994
        %v1996 = vpop.f32.mrb[0].mxu0
        %v1997 = vadd.f32 0.0, %v1996
        %1998 = vdwg.mxu0
        %1999 = vmatprep.subr.mxu0 %v1179
        %2000 = vmatpush1.msra.mxu0 %v1178
        %2001 = vmatprep.subr.mxu0 %v1184
        %2002 = vmatpush1.msra.mxu0 %v1183
        %2003 = vmatprep.subr.mxu0 %v1189
        %2004 = vmatpush1.msra.mxu0 %v1188
        %2005 = vmatprep.subr.mxu0 %v1194
        %2006 = vmatpush1.msra.mxu0 %v1193
        %2007 = vmatprep.subr.mxu0 %v1199
        %2008 = vmatpush1.msra.mxu0 %v1198
        %2009 = vmatprep.subr.mxu0 %v1204
        %2010 = vmatpush1.msra.mxu0 %v1203
        %2011 = vmatprep.subr.mxu0 %v1209
        %2012 = vmatpush1.msra.mxu0 %v1208
        %2013 = vmatprep.subr.mxu0 %v1214
        %2014 = vmatpush1.msra.mxu0 %v1213
        %2015 = vmatprep.subr.mxu0 %v1219
        %2016 = vmatpush1.msra.mxu0 %v1218
        %2017 = vmatprep.subr.mxu0 %v1224
        %2018 = vmatpush1.msra.mxu0 %v1223
        %2019 = vmatprep.subr.mxu0 %v1229
        %2020 = vmatpush1.msra.mxu0 %v1228
        %2021 = vmatprep.subr.mxu0 %v1234
        %2022 = vmatpush1.msra.mxu0 %v1233
        %2023 = vmatprep.subr.mxu0 %v1239
        %2024 = vmatpush1.msra.mxu0 %v1238
        %2025 = vmatprep.subr.mxu0 %v1244
        %2026 = vmatpush1.msra.mxu0 %v1243
        %2027 = vmatprep.subr.mxu0 %v1249
        %2028 = vmatpush1.msra.mxu0 %v1248
        %2029 = vmatprep.subr.mxu0 %v1254
        %2030 = vmatpush1.msra.mxu0 %v1253
        %2031 = vmatprep.subr.mxu0 %v1259
        %2032 = vmatpush1.msra.mxu0 %v1258
        %2033 = vmatprep.subr.mxu0 %v1264
        %2034 = vmatpush1.msra.mxu0 %v1263
        %2035 = vmatprep.subr.mxu0 %v1269
        %2036 = vmatpush1.msra.mxu0 %v1268
        %2037 = vmatprep.subr.mxu0 %v1274
        %2038 = vmatpush1.msra.mxu0 %v1273
        %2039 = vmatprep.subr.mxu0 %v1279
        %2040 = vmatpush1.msra.mxu0 %v1278
        %2041 = vmatprep.subr.mxu0 %v1284
        %2042 = vmatpush1.msra.mxu0 %v1283
        %2043 = vmatprep.subr.mxu0 %v1289
        %2044 = vmatpush1.msra.mxu0 %v1288
        %2045 = vmatprep.subr.mxu0 %v1294
        %2046 = vmatpush1.msra.mxu0 %v1293
        %2047 = vmatprep.subr.mxu0 %v1299
        %2048 = vmatpush1.msra.mxu0 %v1298
        %2049 = vmatprep.subr.mxu0 %v1304
        %2050 = vmatpush1.msra.mxu0 %v1303
        %2051 = vmatprep.subr.mxu0 %v1309
        %2052 = vmatpush1.msra.mxu0 %v1308
        %2053 = vmatprep.subr.mxu0 %v1314
        %2054 = vmatpush1.msra.mxu0 %v1313
        %2055 = vmatprep.subr.mxu0 %v1319
        %2056 = vmatpush1.msra.mxu0 %v1318
        %2057 = vmatprep.subr.mxu0 %v1324
        %2058 = vmatpush1.msra.mxu0 %v1323
        %2059 = vmatprep.subr.mxu0 %v1329
        %2060 = vmatpush1.msra.mxu0 %v1328
        %2061 = vmatprep.subr.mxu0 %v1334
        %2062 = vmatpush1.msra.mxu0 %v1333
        %2063 = vmatprep.mubr.f32.mxu0 %v1011
        %2064 = vmatmul.mubr.f32.gmra.mrb[0].mxu0 %v1010
        %v2065 = vpop.f32.mrb[0].mxu0
        %v2066 = vadd.f32 %v1995, %v2065
        %v2067 = vpop.f32.mrb[0].mxu0
        %v2068 = vadd.f32 %v1997, %v2067
        %2069 = vdwg.mxu0
        %2070 = vmatprep.subr.mxu0 %v1339
        %2071 = vmatpush1.msra.mxu0 %v1338
        %2072 = vmatprep.subr.mxu0 %v1344
        %2073 = vmatpush1.msra.mxu0 %v1343
        %2074 = vmatprep.subr.mxu0 %v1349
        %2075 = vmatpush1.msra.mxu0 %v1348
        %2076 = vmatprep.subr.mxu0 %v1354
        %2077 = vmatpush1.msra.mxu0 %v1353
        %2078 = vmatprep.subr.mxu0 %v1359
        %2079 = vmatpush1.msra.mxu0 %v1358
        %2080 = vmatprep.subr.mxu0 %v1364
        %2081 = vmatpush1.msra.mxu0 %v1363
        %2082 = vmatprep.subr.mxu0 %v1369
        %2083 = vmatpush1.msra.mxu0 %v1368
        %2084 = vmatprep.subr.mxu0 %v1374
        %2085 = vmatpush1.msra.mxu0 %v1373
        %2086 = vmatprep.subr.mxu0 %v1379
        %2087 = vmatpush1.msra.mxu0 %v1378
        %2088 = vmatprep.subr.mxu0 %v1384
        %2089 = vmatpush1.msra.mxu0 %v1383
        %2090 = vmatprep.subr.mxu0 %v1389
        %2091 = vmatpush1.msra.mxu0 %v1388
        %2092 = vmatprep.subr.mxu0 %v1394
        %2093 = vmatpush1.msra.mxu0 %v1393
        %2094 = vmatprep.subr.mxu0 %v1399
        %2095 = vmatpush1.msra.mxu0 %v1398
        %2096 = vmatprep.subr.mxu0 %v1404
        %2097 = vmatpush1.msra.mxu0 %v1403
        %2098 = vmatprep.subr.mxu0 %v1409
        %2099 = vmatpush1.msra.mxu0 %v1408
        %2100 = vmatprep.subr.mxu0 %v1414
        %2101 = vmatpush1.msra.mxu0 %v1413
        %2102 = vmatprep.subr.mxu0 %v1419
        %2103 = vmatpush1.msra.mxu0 %v1418
        %2104 = vmatprep.subr.mxu0 %v1424
        %2105 = vmatpush1.msra.mxu0 %v1423
        %2106 = vmatprep.subr.mxu0 %v1429
        %2107 = vmatpush1.msra.mxu0 %v1428
        %2108 = vmatprep.subr.mxu0 %v1434
        %2109 = vmatpush1.msra.mxu0 %v1433
        %2110 = vmatprep.subr.mxu0 %v1439
        %2111 = vmatpush1.msra.mxu0 %v1438
        %2112 = vmatprep.subr.mxu0 %v1444
        %2113 = vmatpush1.msra.mxu0 %v1443
        %2114 = vmatprep.subr.mxu0 %v1449
        %2115 = vmatpush1.msra.mxu0 %v1448
        %2116 = vmatprep.subr.mxu0 %v1454
        %2117 = vmatpush1.msra.mxu0 %v1453
        %2118 = vmatprep.subr.mxu0 %v1459
        %2119 = vmatpush1.msra.mxu0 %v1458
        %2120 = vmatprep.subr.mxu0 %v1464
        %2121 = vmatpush1.msra.mxu0 %v1463
        %2122 = vmatprep.subr.mxu0 %v1469
        %2123 = vmatpush1.msra.mxu0 %v1468
        %2124 = vmatprep.subr.mxu0 %v1474
        %2125 = vmatpush1.msra.mxu0 %v1473
        %2126 = vmatprep.subr.mxu0 %v1479
        %2127 = vmatpush1.msra.mxu0 %v1478
        %2128 = vmatprep.subr.mxu0 %v1484
        %2129 = vmatpush1.msra.mxu0 %v1483
        %2130 = vmatprep.subr.mxu0 %v1489
        %2131 = vmatpush1.msra.mxu0 %v1488
        %2132 = vmatprep.subr.mxu0 %v1494
        %2133 = vmatpush1.msra.mxu0 %v1493
        %2134 = vmatprep.mubr.f32.mxu0 %v1013
        %2135 = vmatmul.mubr.f32.gmra.mrb[0].mxu0 %v1012
        %v2136 = vpop.f32.mrb[0].mxu0
        %v2137 = vadd.f32 %v2066, %v2136
        %v2138 = vpop.f32.mrb[0].mxu0
        %v2139 = vadd.f32 %v2068, %v2138
        %2140 = vdwg.mxu0
        %2141 = vmatprep.subr.mxu0 %v1499
        %2142 = vmatpush1.msra.mxu0 %v1498
        %2143 = vmatprep.subr.mxu0 %v1504
        %2144 = vmatpush1.msra.mxu0 %v1503
        %2145 = vmatprep.subr.mxu0 %v1509
        %2146 = vmatpush1.msra.mxu0 %v1508
        %2147 = vmatprep.subr.mxu0 %v1514
        %2148 = vmatpush1.msra.mxu0 %v1513
        %2149 = vmatprep.subr.mxu0 %v1519
        %2150 = vmatpush1.msra.mxu0 %v1518
        %2151 = vmatprep.subr.mxu0 %v1524
        %2152 = vmatpush1.msra.mxu0 %v1523
        %2153 = vmatprep.subr.mxu0 %v1529
        %2154 = vmatpush1.msra.mxu0 %v1528
        %2155 = vmatprep.subr.mxu0 %v1534
        %2156 = vmatpush1.msra.mxu0 %v1533
        %2157 = vmatprep.subr.mxu0 %v1539
        %2158 = vmatpush1.msra.mxu0 %v1538
        %2159 = vmatprep.subr.mxu0 %v1544
        %2160 = vmatpush1.msra.mxu0 %v1543
        %2161 = vmatprep.subr.mxu0 %v1549
        %2162 = vmatpush1.msra.mxu0 %v1548
        %2163 = vmatprep.subr.mxu0 %v1554
        %2164 = vmatpush1.msra.mxu0 %v1553
        %2165 = vmatprep.subr.mxu0 %v1559
        %2166 = vmatpush1.msra.mxu0 %v1558
        %2167 = vmatprep.subr.mxu0 %v1564
        %2168 = vmatpush1.msra.mxu0 %v1563
        %2169 = vmatprep.subr.mxu0 %v1569
        %2170 = vmatpush1.msra.mxu0 %v1568
        %2171 = vmatprep.subr.mxu0 %v1574
        %2172 = vmatpush1.msra.mxu0 %v1573
        %2173 = vmatprep.subr.mxu0 %v1579
        %2174 = vmatpush1.msra.mxu0 %v1578
        %2175 = vmatprep.subr.mxu0 %v1584
        %2176 = vmatpush1.msra.mxu0 %v1583
        %2177 = vmatprep.subr.mxu0 %v1589
        %2178 = vmatpush1.msra.mxu0 %v1588
        %2179 = vmatprep.subr.mxu0 %v1594
        %2180 = vmatpush1.msra.mxu0 %v1593
        %2181 = vmatprep.subr.mxu0 %v1599
        %2182 = vmatpush1.msra.mxu0 %v1598
        %2183 = vmatprep.subr.mxu0 %v1604
        %2184 = vmatpush1.msra.mxu0 %v1603
        %2185 = vmatprep.subr.mxu0 %v1609
        %2186 = vmatpush1.msra.mxu0 %v1608
        %2187 = vmatprep.subr.mxu0 %v1614
        %2188 = vmatpush1.msra.mxu0 %v1613
        %2189 = vmatprep.subr.mxu0 %v1619
        %2190 = vmatpush1.msra.mxu0 %v1618
        %2191 = vmatprep.subr.mxu0 %v1624
        %2192 = vmatpush1.msra.mxu0 %v1623
        %2193 = vmatprep.subr.mxu0 %v1629
        %2194 = vmatpush1.msra.mxu0 %v1628
        %2195 = vmatprep.subr.mxu0 %v1634
        %2196 = vmatpush1.msra.mxu0 %v1633
        %2197 = vmatprep.subr.mxu0 %v1639
        %2198 = vmatpush1.msra.mxu0 %v1638
        %2199 = vmatprep.subr.mxu0 0.0
        %2200 = vmatpush1.msra.mxu0 0.0
        %2201 = vmatprep.subr.mxu0 0.0
        %2202 = vmatpush1.msra.mxu0 0.0
        %2203 = vmatprep.subr.mxu0 0.0
        %2204 = vmatpush1.msra.mxu0 0.0
        %2205 = vmatprep.mubr.f32.mxu0 %v1642
        %2206 = vmatmul.mubr.f32.gmra.mrb[0].mxu0 %v1014
        %v2207 = vpop.f32.mrb[0].mxu0
        %v2208 = vadd.f32 %v2137, %v2207
        %v2209 = vpop.f32.mrb[0].mxu0
        %v2210 = vadd.f32 %v2139, %v2209
        %2211 = vdwg.mxu0
        %2212 = vmatprep.subr.mxu0 0.0
        %2213 = vmatpush1.msra.mxu0 %v1020
        %2214 = vmatprep.subr.mxu0 0.0
        %2215 = vmatpush1.msra.mxu0 %v1025
        %2216 = vmatprep.subr.mxu0 0.0
        %2217 = vmatpush1.msra.mxu0 %v1030
        %2218 = vmatprep.subr.mxu0 0.0
        %2219 = vmatpush1.msra.mxu0 %v1035
        %2220 = vmatprep.subr.mxu0 0.0
        %2221 = vmatpush1.msra.mxu0 %v1040
        %2222 = vmatprep.subr.mxu0 0.0
        %2223 = vmatpush1.msra.mxu0 %v1045
        %2224 = vmatprep.subr.mxu0 0.0
        %2225 = vmatpush1.msra.mxu0 %v1050
        %2226 = vmatprep.subr.mxu0 0.0
        %2227 = vmatpush1.msra.mxu0 %v1055
        %2228 = vmatprep.subr.mxu0 0.0
        %2229 = vmatpush1.msra.mxu0 %v1060
        %2230 = vmatprep.subr.mxu0 0.0
        %2231 = vmatpush1.msra.mxu0 %v1065
        %2232 = vmatprep.subr.mxu0 0.0
        %2233 = vmatpush1.msra.mxu0 %v1070
        %2234 = vmatprep.subr.mxu0 0.0
        %2235 = vmatpush1.msra.mxu0 %v1075
        %2236 = vmatprep.subr.mxu0 0.0
        %2237 = vmatpush1.msra.mxu0 %v1080
        %2238 = vmatprep.subr.mxu0 0.0
        %2239 = vmatpush1.msra.mxu0 %v1085
        %2240 = vmatprep.subr.mxu0 0.0
        %2241 = vmatpush1.msra.mxu0 %v1090
        %2242 = vmatprep.subr.mxu0 0.0
        %2243 = vmatpush1.msra.mxu0 %v1095
        %2244 = vmatprep.subr.mxu0 0.0
        %2245 = vmatpush1.msra.mxu0 %v1100
        %2246 = vmatprep.subr.mxu0 0.0
        %2247 = vmatpush1.msra.mxu0 %v1105
        %2248 = vmatprep.subr.mxu0 0.0
        %2249 = vmatpush1.msra.mxu0 %v1110
        %2250 = vmatprep.subr.mxu0 0.0
        %2251 = vmatpush1.msra.mxu0 %v1115
        %2252 = vmatprep.subr.mxu0 0.0
        %2253 = vmatpush1.msra.mxu0 %v1120
        %2254 = vmatprep.subr.mxu0 0.0
        %2255 = vmatpush1.msra.mxu0 %v1125
        %2256 = vmatprep.subr.mxu0 0.0
        %2257 = vmatpush1.msra.mxu0 %v1130
        %2258 = vmatprep.subr.mxu0 0.0
        %2259 = vmatpush1.msra.mxu0 %v1135
        %2260 = vmatprep.subr.mxu0 0.0
        %2261 = vmatpush1.msra.mxu0 %v1140
        %2262 = vmatprep.subr.mxu0 0.0
        %2263 = vmatpush1.msra.mxu0 %v1145
        %2264 = vmatprep.subr.mxu0 0.0
        %2265 = vmatpush1.msra.mxu0 %v1150
        %2266 = vmatprep.subr.mxu0 0.0
        %2267 = vmatpush1.msra.mxu0 %v1155
        %2268 = vmatprep.subr.mxu0 0.0
        %2269 = vmatpush1.msra.mxu0 %v1160
        %2270 = vmatprep.subr.mxu0 0.0
        %2271 = vmatpush1.msra.mxu0 %v1165
        %2272 = vmatprep.subr.mxu0 0.0
        %2273 = vmatpush1.msra.mxu0 %v1170
        %2274 = vmatprep.subr.mxu0 0.0
        %2275 = vmatpush1.msra.mxu0 %v1175
        %2276 = vmatprep.mubr.f32.mxu0 %v1009
        %2277 = vmatmul.mubr.f32.gmra.mrb[0].mxu0 %v1008
        %v2278 = vpop.f32.mrb[0].mxu0
        %v2279 = vadd.f32 0.0, %v2278
        %v2280 = vpop.f32.mrb[0].mxu0
        %2281 = vdwg.mxu0
        %2282 = vmatprep.subr.mxu0 0.0
        %2283 = vmatpush1.msra.mxu0 %v1180
        %2284 = vmatprep.subr.mxu0 0.0
        %2285 = vmatpush1.msra.mxu0 %v1185
        %2286 = vmatprep.subr.mxu0 0.0
        %2287 = vmatpush1.msra.mxu0 %v1190
        %2288 = vmatprep.subr.mxu0 0.0
        %2289 = vmatpush1.msra.mxu0 %v1195
        %2290 = vmatprep.subr.mxu0 0.0
        %2291 = vmatpush1.msra.mxu0 %v1200
        %2292 = vmatprep.subr.mxu0 0.0
        %2293 = vmatpush1.msra.mxu0 %v1205
        %2294 = vmatprep.subr.mxu0 0.0
        %2295 = vmatpush1.msra.mxu0 %v1210
        %2296 = vmatprep.subr.mxu0 0.0
        %2297 = vmatpush1.msra.mxu0 %v1215
        %2298 = vmatprep.subr.mxu0 0.0
        %2299 = vmatpush1.msra.mxu0 %v1220
        %2300 = vmatprep.subr.mxu0 0.0
        %2301 = vmatpush1.msra.mxu0 %v1225
        %2302 = vmatprep.subr.mxu0 0.0
        %2303 = vmatpush1.msra.mxu0 %v1230
        %2304 = vmatprep.subr.mxu0 0.0
        %2305 = vmatpush1.msra.mxu0 %v1235
        %2306 = vmatprep.subr.mxu0 0.0
        %2307 = vmatpush1.msra.mxu0 %v1240
        %2308 = vmatprep.subr.mxu0 0.0
        %2309 = vmatpush1.msra.mxu0 %v1245
        %2310 = vmatprep.subr.mxu0 0.0
        %2311 = vmatpush1.msra.mxu0 %v1250
        %2312 = vmatprep.subr.mxu0 0.0
        %2313 = vmatpush1.msra.mxu0 %v1255
        %2314 = vmatprep.subr.mxu0 0.0
        %2315 = vmatpush1.msra.mxu0 %v1260
        %2316 = vmatprep.subr.mxu0 0.0
        %2317 = vmatpush1.msra.mxu0 %v1265
        %2318 = vmatprep.subr.mxu0 0.0
        %2319 = vmatpush1.msra.mxu0 %v1270
        %2320 = vmatprep.subr.mxu0 0.0
        %2321 = vmatpush1.msra.mxu0 %v1275
        %2322 = vmatprep.subr.mxu0 0.0
        %2323 = vmatpush1.msra.mxu0 %v1280
        %2324 = vmatprep.subr.mxu0 0.0
        %2325 = vmatpush1.msra.mxu0 %v1285
        %2326 = vmatprep.subr.mxu0 0.0
        %2327 = vmatpush1.msra.mxu0 %v1290
        %2328 = vmatprep.subr.mxu0 0.0
        %2329 = vmatpush1.msra.mxu0 %v1295
        %2330 = vmatprep.subr.mxu0 0.0
        %2331 = vmatpush1.msra.mxu0 %v1300
        %2332 = vmatprep.subr.mxu0 0.0
        %2333 = vmatpush1.msra.mxu0 %v1305
        %2334 = vmatprep.subr.mxu0 0.0
        %2335 = vmatpush1.msra.mxu0 %v1310
        %2336 = vmatprep.subr.mxu0 0.0
        %2337 = vmatpush1.msra.mxu0 %v1315
        %2338 = vmatprep.subr.mxu0 0.0
        %2339 = vmatpush1.msra.mxu0 %v1320
        %2340 = vmatprep.subr.mxu0 0.0
        %2341 = vmatpush1.msra.mxu0 %v1325
        %2342 = vmatprep.subr.mxu0 0.0
        %2343 = vmatpush1.msra.mxu0 %v1330
        %2344 = vmatprep.subr.mxu0 0.0
        %2345 = vmatpush1.msra.mxu0 %v1335
        %2346 = vmatprep.mubr.f32.mxu0 %v1011
        %2347 = vmatmul.mubr.f32.gmra.mrb[0].mxu0 %v1010
        %v2348 = vpop.f32.mrb[0].mxu0
        %v2349 = vadd.f32 %v2279, %v2348
        %v2350 = vpop.f32.mrb[0].mxu0
        %2351 = vdwg.mxu0
        %2352 = vmatprep.subr.mxu0 0.0
        %2353 = vmatpush1.msra.mxu0 %v1340
        %2354 = vmatprep.subr.mxu0 0.0
        %2355 = vmatpush1.msra.mxu0 %v1345
        %2356 = vmatprep.subr.mxu0 0.0
        %2357 = vmatpush1.msra.mxu0 %v1350
        %2358 = vmatprep.subr.mxu0 0.0
        %2359 = vmatpush1.msra.mxu0 %v1355
        %2360 = vmatprep.subr.mxu0 0.0
        %2361 = vmatpush1.msra.mxu0 %v1360
        %2362 = vmatprep.subr.mxu0 0.0
        %2363 = vmatpush1.msra.mxu0 %v1365
        %2364 = vmatprep.subr.mxu0 0.0
        %2365 = vmatpush1.msra.mxu0 %v1370
        %2366 = vmatprep.subr.mxu0 0.0
        %2367 = vmatpush1.msra.mxu0 %v1375
        %2368 = vmatprep.subr.mxu0 0.0
        %2369 = vmatpush1.msra.mxu0 %v1380
        %2370 = vmatprep.subr.mxu0 0.0
        %2371 = vmatpush1.msra.mxu0 %v1385
        %2372 = vmatprep.subr.mxu0 0.0
        %2373 = vmatpush1.msra.mxu0 %v1390
        %2374 = vmatprep.subr.mxu0 0.0
        %2375 = vmatpush1.msra.mxu0 %v1395
        %2376 = vmatprep.subr.mxu0 0.0
        %2377 = vmatpush1.msra.mxu0 %v1400
        %2378 = vmatprep.subr.mxu0 0.0
        %2379 = vmatpush1.msra.mxu0 %v1405
        %2380 = vmatprep.subr.mxu0 0.0
        %2381 = vmatpush1.msra.mxu0 %v1410
        %2382 = vmatprep.subr.mxu0 0.0
        %2383 = vmatpush1.msra.mxu0 %v1415
        %2384 = vmatprep.subr.mxu0 0.0
        %2385 = vmatpush1.msra.mxu0 %v1420
        %2386 = vmatprep.subr.mxu0 0.0
        %2387 = vmatpush1.msra.mxu0 %v1425
        %2388 = vmatprep.subr.mxu0 0.0
        %2389 = vmatpush1.msra.mxu0 %v1430
        %2390 = vmatprep.subr.mxu0 0.0
        %2391 = vmatpush1.msra.mxu0 %v1435
        %2392 = vmatprep.subr.mxu0 0.0
        %2393 = vmatpush1.msra.mxu0 %v1440
        %2394 = vmatprep.subr.mxu0 0.0
        %2395 = vmatpush1.msra.mxu0 %v1445
        %2396 = vmatprep.subr.mxu0 0.0
        %2397 = vmatpush1.msra.mxu0 %v1450
        %2398 = vmatprep.subr.mxu0 0.0
        %2399 = vmatpush1.msra.mxu0 %v1455
        %2400 = vmatprep.subr.mxu0 0.0
        %2401 = vmatpush1.msra.mxu0 %v1460
        %2402 = vmatprep.subr.mxu0 0.0
        %2403 = vmatpush1.msra.mxu0 %v1465
        %2404 = vmatprep.subr.mxu0 0.0
        %2405 = vmatpush1.msra.mxu0 %v1470
        %2406 = vmatprep.subr.mxu0 0.0
        %2407 = vmatpush1.msra.mxu0 %v1475
        %2408 = vmatprep.subr.mxu0 0.0
        %2409 = vmatpush1.msra.mxu0 %v1480
        %2410 = vmatprep.subr.mxu0 0.0
        %2411 = vmatpush1.msra.mxu0 %v1485
        %2412 = vmatprep.subr.mxu0 0.0
        %2413 = vmatpush1.msra.mxu0 %v1490
        %2414 = vmatprep.subr.mxu0 0.0
        %2415 = vmatpush1.msra.mxu0 %v1495
        %2416 = vmatprep.mubr.f32.mxu0 %v1013
        %2417 = vmatmul.mubr.f32.gmra.mrb[0].mxu0 %v1012
        %v2418 = vpop.f32.mrb[0].mxu0
        %v2419 = vadd.f32 %v2349, %v2418
        %v2420 = vpop.f32.mrb[0].mxu0
        %2421 = vdwg.mxu0
        %2422 = vmatprep.subr.mxu0 0.0
        %2423 = vmatpush1.msra.mxu0 %v1500
        %2424 = vmatprep.subr.mxu0 0.0
        %2425 = vmatpush1.msra.mxu0 %v1505
        %2426 = vmatprep.subr.mxu0 0.0
        %2427 = vmatpush1.msra.mxu0 %v1510
        %2428 = vmatprep.subr.mxu0 0.0
        %2429 = vmatpush1.msra.mxu0 %v1515
        %2430 = vmatprep.subr.mxu0 0.0
        %2431 = vmatpush1.msra.mxu0 %v1520
        %2432 = vmatprep.subr.mxu0 0.0
        %2433 = vmatpush1.msra.mxu0 %v1525
        %2434 = vmatprep.subr.mxu0 0.0
        %2435 = vmatpush1.msra.mxu0 %v1530
        %2436 = vmatprep.subr.mxu0 0.0
        %2437 = vmatpush1.msra.mxu0 %v1535
        %2438 = vmatprep.subr.mxu0 0.0
        %2439 = vmatpush1.msra.mxu0 %v1540
        %2440 = vmatprep.subr.mxu0 0.0
        %2441 = vmatpush1.msra.mxu0 %v1545
        %2442 = vmatprep.subr.mxu0 0.0
        %2443 = vmatpush1.msra.mxu0 %v1550
        %2444 = vmatprep.subr.mxu0 0.0
        %2445 = vmatpush1.msra.mxu0 %v1555
        %2446 = vmatprep.subr.mxu0 0.0
        %2447 = vmatpush1.msra.mxu0 %v1560
        %2448 = vmatprep.subr.mxu0 0.0
        %2449 = vmatpush1.msra.mxu0 %v1565
        %2450 = vmatprep.subr.mxu0 0.0
        %2451 = vmatpush1.msra.mxu0 %v1570
        %2452 = vmatprep.subr.mxu0 0.0
        %2453 = vmatpush1.msra.mxu0 %v1575
        %2454 = vmatprep.subr.mxu0 0.0
        %2455 = vmatpush1.msra.mxu0 %v1580
        %2456 = vmatprep.subr.mxu0 0.0
        %2457 = vmatpush1.msra.mxu0 %v1585
        %2458 = vmatprep.subr.mxu0 0.0
        %2459 = vmatpush1.msra.mxu0 %v1590
        %2460 = vmatprep.subr.mxu0 0.0
        %2461 = vmatpush1.msra.mxu0 %v1595
        %2462 = vmatprep.subr.mxu0 0.0
        %2463 = vmatpush1.msra.mxu0 %v1600
        %2464 = vmatprep.subr.mxu0 0.0
        %2465 = vmatpush1.msra.mxu0 %v1605
        %2466 = vmatprep.subr.mxu0 0.0
        %2467 = vmatpush1.msra.mxu0 %v1610
        %2468 = vmatprep.subr.mxu0 0.0
        %2469 = vmatpush1.msra.mxu0 %v1615
        %2470 = vmatprep.subr.mxu0 0.0
        %2471 = vmatpush1.msra.mxu0 %v1620
        %2472 = vmatprep.subr.mxu0 0.0
        %2473 = vmatpush1.msra.mxu0 %v1625
        %2474 = vmatprep.subr.mxu0 0.0
        %2475 = vmatpush1.msra.mxu0 %v1630
        %2476 = vmatprep.subr.mxu0 0.0
        %2477 = vmatpush1.msra.mxu0 %v1635
        %2478 = vmatprep.subr.mxu0 0.0
        %2479 = vmatpush1.msra.mxu0 %v1640
        %2480 = vmatprep.subr.mxu0 0.0
        %2481 = vmatpush1.msra.mxu0 0.0
        %2482 = vmatprep.subr.mxu0 0.0
        %2483 = vmatpush1.msra.mxu0 0.0
        %2484 = vmatprep.subr.mxu0 0.0
        %2485 = vmatpush1.msra.mxu0 0.0
        %2486 = vmatprep.mubr.f32.mxu0 %v1642
        %2487 = vmatmul.mubr.f32.gmra.mrb[0].mxu0 %v1014
        %v2488 = vpop.f32.mrb[0].mxu0
        %v2489 = vadd.f32 %v2419, %v2488
        %v2490 = vpop.f32.mrb[0].mxu0
        %2491 = vdwg.mxu0
        %v2492 = vmax.f32 %v1924, 0.0
        %v2493 = vmax.f32 %v1926, 0.0
        %v2494 = vmax.f32 %v2208, 0.0
        %v2495 = vmax.f32 %v2210, 0.0
        %v2496 = vmax.f32 %v2489, 0.0
        %2497 = vst [vmem:[%s364] sm:$0xff] %v2492
        %2498 = vst [vmem:[%s364 + $0x8] sm:$0xff] %v2493
        %2499 = vst [vmem:[%s364 + $0x10] sm:$0xff] %v2494
        %2500 = vst [vmem:[%s364 + $0x18] sm:$0xff] %v2495
        %2501 = vst [vmem:[%s364 + $0x20] sm:$0xff] %v2496
        %s2502 = smul.u32 5, %s24
        %p2503 = scmp.lt.s32.totalorder %s2502, 19
        %s2504 = scalar_select %p2503, %s2502, 19
        %s2505 = smul.addr %s2504, 8
        %s2506 = scalar_lea.vmem %s7, %s2505
        // Predicated region
        $region73: #{mlp_forward.1} parent=47 // pred_check
          %p2507 = pneg %p194
        $region74: #{mlp_forward.1} parent=47 // pred_check_branch
          %2509 = sbr.rel (%p2507) target = $region76
        $region75: #{mlp_forward.1} parent=47 // pred_region
          %s2510 = smul.u32 5, %s24
        $region76: #{mlp_forward.1} parent=47 // pred_fallthru
          _
      $region48: #{mlp_forward.1} parent=5 // pred_fallthru
        _
      %p2511 = scmp.le.s32.totalorder 2, %s19
      // Predicated region
      $region77: #{mlp_forward.1} parent=5 // pred_check
        %p2512 = pneg %p2511
      $region78: #{mlp_forward.1} parent=5 // pred_check_branch
        %2514 = sbr.rel (%p2512) target = $region80
      $region79: #{mlp_forward.1} parent=5 // pred_region
        %s2515 = ssub.s32 %s19, 2
        // Predicated region
        $region81: #{mlp_forward.1} parent=79 // pred_check
          %p2516 = pneg %p200
        $region82: #{mlp_forward.1} parent=79 // pred_check_branch
          %2518 = sbr.rel (%p2516) target = $region84
        $region83: #{mlp_forward.1} parent=79 // pred_region
          %s2519 = smul.u32 5, %s25
          %p2520 = scmp.lt.s32.totalorder %s2519, 19
          %s2521 = scalar_select %p2520, %s2519, 19
          %s2522 = smul.addr %s2521, 8
          %s2523 = scalar_lea.vmem %s7, %s2522
        $region84: #{mlp_forward.1} parent=79 // pred_fallthru
          _
      $region80: #{mlp_forward.1} parent=5 // pred_fallthru
        _
    $region6: #{mlp_forward.1} parent=1 // loop_footer
      %s23 = sadd.s32 1, %s19
    $region7: #{mlp_forward.1} parent=1 // loop_footer_branch
      %18 = sbr.rel target = $region3
    $region8: #{mlp_forward.1} parent=1 // loop_exit
      _
    %2524 = vsyncpa [#allocation3], 1
    %s2525 = scalar_lea.sflag [#allocation3], 1
    %2526 = vsyncpa %s2525, 1
    %2527 = vsyncpa [#allocation5], 1
    %2528 = vsyncpa [#allocation8], 1
    %2529 = vsyncpa [#allocation11], 1
    %s2530 = scalar_lea.sflag [#allocation11], 1
    %2531 = vsyncpa %s2530, 1

</llo_original>
